<compile_context>
chip_gen: v7x
topology: tpu7x:2x2x1
jax: 0.10.0
libtpu: 0.0.40
codegen_flags: <defaults>
</compile_context>

<pallas_src>
import jax
import jax.numpy as jnp
import numpy as np
from jax import lax
from jax.experimental import pallas as pl
from jax.experimental.pallas import tpu as pltpu

# ---------------- model configuration (model_config / project_config) ----------------
FIRST_FILTER_SIZE = 4
KERNEL_SIZE = 3                       # odd kernel -> encoder_padding = 0
DEPTH = 3
DROPOUT = 0.0                         # TODO(synk): training-mode Dropout with p>0 is stochastic; p=0.0 is identity.
LATENT_DIM_EXP = 3
LATENT_DIM = 2 ** LATENT_DIM_EXP      # 8
IN_CHANNELS = 20
SEQ_LEN = 9                           # each valid conv shrinks L by 2; 9 -> 3 after depth=3 convs

ENC_PAD = KERNEL_SIZE // 2 - 1        # encoder_padding = 0

_f = [2 ** i for i in range(FIRST_FILTER_SIZE + 1)]
_f.reverse()
ENC_FILTERS = _f[:DEPTH]                              # [16, 8, 4]
LAST_FILTER_SIZE = ENC_FILTERS[-1]                    # 4
LAST_FEATURE_SIZE = 10 - (DEPTH * 2 + 1)              # 3
LAST_DIM = LAST_FILTER_SIZE * LAST_FEATURE_SIZE       # 12
DEC_FILTERS = list(ENC_FILTERS)                       # [16, 8, 4]

ENC_OUT_LENS = []
_L = SEQ_LEN
for _ in ENC_FILTERS:
    _L = _L + 2 * ENC_PAD - KERNEL_SIZE + 1
    ENC_OUT_LENS.append(_L)                           # [7, 5, 3]
assert ENC_OUT_LENS[-1] == LAST_FEATURE_SIZE


# ---------------- fused Pallas kernel ----------------

def _build_fused_kernel(inv_ns, n_enc):
    """Single fused CVAE_CNN forward kernel; all operands & intermediates in VMEM."""

    def kernel(*refs):
        it = iter(refs)
        x_ref, eps_ref = next(it), next(it)
        enc = [(next(it), next(it), next(it), next(it)) for _ in range(n_enc)]
        wm_ref, bm_ref, wv_ref, bv_ref = next(it), next(it), next(it), next(it)
        wdec_ref, bdec_ref = next(it), next(it)
        xrec_ref, mean_ref, logvar_ref = next(it), next(it), next(it)

        def mm(a, b_ref):
            return jnp.dot(a, b_ref[...], preferred_element_type=jnp.float32)

        # ---- encoder: Conv1d (bias dropped; cancelled by BN) -> BN(batch stats) -> ReLU ----
        h = x_ref[...]                                       # (B, Cin*Lin), channel-major
        for (t_ref, p_ref, g_ref, be_ref), inv_n in zip(enc, inv_ns):
            y = mm(h, t_ref)                                 # conv as one MXU matmul
            # per-channel training-mode statistics: sublane (batch) reduce first,
            # then one small 0/1 pool+broadcast matmul on a (1, C*L) row.
            y_sum = jnp.sum(y, axis=0, keepdims=True)
            mean_cols = mm(y_sum, p_ref) * inv_n
            centered = y - mean_cols
            sq_sum = jnp.sum(centered * centered, axis=0, keepdims=True)
            var_cols = mm(sq_sum, p_ref) * inv_n
            scale = g_ref[...] * lax.rsqrt(var_cols + 1e-5)  # folded BN scale (gamma/std)
            h = jnp.maximum(centered * scale + be_ref[...], 0.0)   # Dropout(p=0.0) == identity

        # ---- latent head: Linear -> (mean, log_var) -> reparametrize ----
        mean = mm(h, wm_ref) + bm_ref[...]
        log_var = mm(h, wv_ref) + bv_ref[...]
        z = mean + eps_ref[...] * jnp.exp(log_var * 0.5)

        # ---- decoder: whole Linear + 4x ConvTranspose1d stack pre-folded into one affine ----
        xrec_ref[...] = mm(z, wdec_ref) + bdec_ref[...]
        mean_ref[...] = mean
        logvar_ref[...] = log_var

    return kernel


def cvae_forward(prepped_params, x, y, eps):
    """Fused CVAE_CNN forward. `y` is accepted for API parity with the PyTorch
    module but (exactly like the reference forward) is not used."""
    del y
    B = x.shape[0]
    x_flat = x.reshape(B, IN_CHANNELS * SEQ_LEN)     # NCL -> channel-major flatten (free reshape)
    inv_ns = tuple(1.0 / (B * L) for L in ENC_OUT_LENS)
    kernel = _build_fused_kernel(inv_ns, n_enc=DEPTH)

    n_in = 2 + len(prepped_params)
    vmem = lambda: pl.BlockSpec(memory_space=pltpu.MemorySpace.VMEM)
    out_shape = (
        jax.ShapeDtypeStruct((B, IN_CHANNELS * SEQ_LEN), jnp.float32),
        jax.ShapeDtypeStruct((B, LATENT_DIM), jnp.float32),
        jax.ShapeDtypeStruct((B, LATENT_DIM), jnp.float32),
    )
    xrec_flat, mean, log_var = pl.pallas_call(
        kernel,
        out_shape=out_shape,
        in_specs=[vmem() for _ in range(n_in)],
        out_specs=(vmem(), vmem(), vmem()),
    )(x_flat, eps, *prepped_params)

    x_rec = xrec_flat.reshape(B, IN_CHANNELS, SEQ_LEN)   # channel-major -> NCL (free reshape)
    return x_rec, mean, log_var


# ---------------- one-time parameter / layout preparation ----------------

def _conv1d_toeplitz(w, lin, pad):
    # w: (Cout, Cin, k) PyTorch Conv1d weight -> dense (Cin*lin, Cout*lout) matmul operand
    cout, cin, k = w.shape
    lout = lin + 2 * pad - k + 1
    t = np.zeros((cin * lin, cout * lout), np.float32)
    for co in range(cout):
        for ci in range(cin):
            for tap in range(k):
                for lo in range(lout):
                    li = lo + tap - pad
                    if 0 <= li < lin:
                        t[ci * lin + li, co * lout + lo] = w[co, ci, tap]
    return t, lout


def _convtr1d_toeplitz(w, lin, pad):
    # w: (Cin, Cout, k) PyTorch ConvTranspose1d weight (stride=1) -> (Cin*lin, Cout*lout)
    cin, cout, k = w.shape
    lout = lin + k - 1 - 2 * pad
    t = np.zeros((cin * lin, cout * lout), np.float32)
    for ci in range(cin):
        for co in range(cout):
            for li in range(lin):
                for lo in range(lout):
                    tap = lo - li + pad
                    if 0 <= tap < k:
                        t[ci * lin + li, co * lout + lo] = w[ci, co, tap]
    return t, lout


def prepare_params(params):
    """One-time precompute: bake every conv into a dense matmul operand, expand
    per-channel BN/bias params to column vectors, split the latent Linear, and
    fold the entire (purely affine) decoder into a single (latent, Cout*Lout)
    weight plus bias row."""
    flat = []

    # encoder conv blocks (conv bias omitted: BN mean subtraction cancels it exactly)
    lin = SEQ_LEN
    for (w, _b, gamma, beta) in params["enc_convs"]:
        w = np.asarray(w)
        t, lout = _conv1d_toeplitz(w, lin, ENC_PAD)
        cout = w.shape[0]
        s = np.zeros((cout * lout, cout), np.float32)
        for c in range(cout):
            s[c * lout:(c + 1) * lout, c] = 1.0
        pool = (s @ s.T).astype(np.float32)               # channel pool + broadcast matrix
        g_cols = np.repeat(np.asarray(gamma), lout)[None, :].astype(np.float32)
        b_cols = np.repeat(np.asarray(beta), lout)[None, :].astype(np.float32)
        flat += [jnp.asarray(t), jnp.asarray(pool), jnp.asarray(g_cols), jnp.asarray(b_cols)]
        lin = lout

    # encoder Linear (last_dim -> 2*latent), pre-split into mean / log_var halves
    wl = np.asarray(params["enc_lin_w"]).astype(np.float32)
    bl = np.asarray(params["enc_lin_b"]).astype(np.float32)
    flat += [jnp.asarray(wl[:, :LATENT_DIM]), jnp.asarray(bl[None, :LATENT_DIM]),
             jnp.asarray(wl[:, LATENT_DIM:]), jnp.asarray(bl[None, LATENT_DIM:])]

    # decoder: Linear + 4 ConvTranspose1d with NO nonlinearities between them,
    # so the whole stack is one affine map  z -> z @ W_dec + b_dec  (folded here).
    w_dec = np.asarray(params["dec_lin_w"]).astype(np.float32)          # (latent, last_dim)
    b_dec = np.asarray(params["dec_lin_b"]).astype(np.float32)[None, :] # (1, last_dim)
    lin = LAST_FEATURE_SIZE
    nb = len(params["dec_convs"])
    for i, (w, b) in enumerate(params["dec_convs"]):
        pad = ENC_PAD + 1 if i == nb - 1 else ENC_PAD
        w = np.asarray(w).astype(np.float32)
        t, lout = _convtr1d_toeplitz(w, lin, pad)
        c_cols = np.repeat(np.asarray(b).astype(np.float32), lout)[None, :]
        w_dec = w_dec @ t
        b_dec = b_dec @ t + c_cols
        lin = lout
    assert w_dec.shape == (LATENT_DIM, IN_CHANNELS * SEQ_LEN)
    flat += [jnp.asarray(w_dec), jnp.asarray(b_dec)]

    return tuple(flat)


# ---------------- parameters ----------------

def init_params(key):
    params = {}

    enc_convs = []
    in_c = IN_CHANNELS
    for out_c in ENC_FILTERS:
        key, k1, k2, k3, k4 = jax.random.split(key, 5)
        fan_in = in_c * KERNEL_SIZE
        w = jax.random.normal(k1, (out_c, in_c, KERNEL_SIZE), jnp.float32) / jnp.sqrt(fan_in)
        b = 0.05 * jax.random.normal(k2, (out_c,), jnp.float32)
        gamma = jnp.ones((out_c,), jnp.float32) + 0.05 * jax.random.normal(k3, (out_c,), jnp.float32)
        beta = 0.05 * jax.random.normal(k4, (out_c,), jnp.float32)
        enc_convs.append((w, b, gamma, beta))
        in_c = out_c
    params["enc_convs"] = enc_convs

    key, k1, k2 = jax.random.split(key, 3)
    params["enc_lin_w"] = jax.random.normal(k1, (LAST_DIM, 2 * LATENT_DIM), jnp.float32) / jnp.sqrt(LAST_DIM)
    params["enc_lin_b"] = 0.05 * jax.random.normal(k2, (2 * LATENT_DIM,), jnp.float32)

    key, k1, k2 = jax.random.split(key, 3)
    params["dec_lin_w"] = jax.random.normal(k1, (LATENT_DIM, LAST_DIM), jnp.float32) / jnp.sqrt(LATENT_DIM)
    params["dec_lin_b"] = 0.05 * jax.random.normal(k2, (LAST_DIM,), jnp.float32)

    dec_convs = []
    for i in range(len(DEC_FILTERS) + 1):
        if i == 0:
            in_c, out_c = LAST_FILTER_SIZE, DEC_FILTERS[0]
        elif i == len(DEC_FILTERS):
            in_c, out_c = DEC_FILTERS[i - 1], IN_CHANNELS
        else:
            in_c, out_c = DEC_FILTERS[i - 1], DEC_FILTERS[i]
        key, k1, k2 = jax.random.split(key, 3)
        fan_in = in_c * KERNEL_SIZE
        w = jax.random.normal(k1, (in_c, out_c, KERNEL_SIZE), jnp.float32) / jnp.sqrt(fan_in)
        b = 0.05 * jax.random.normal(k2, (out_c,), jnp.float32)
        dec_convs.append((w, b))
    params["dec_convs"] = dec_convs
    return params


# ---------------- pure-JAX reference (for correctness check only) ----------------

def _ref_conv1d(x, w, b, pad):
    if pad > 0:
        x = jnp.pad(x, ((0, 0), (0, 0), (pad, pad)))
    k = w.shape[2]
    lout = x.shape[2] - k + 1
    cols = jnp.stack([x[:, :, t:t + lout] for t in range(k)], axis=-1)   # (B, Cin, Lout, k)
    return jnp.einsum("bclt,oct->bol", cols, w) + b[None, :, None]


def _ref_convtr1d(x, w, b, pad):
    k = w.shape[2]
    w_conv = jnp.flip(w, axis=2).transpose(1, 0, 2)
    return _ref_conv1d(x, w_conv, b, k - 1 - pad)


def _ref_bn_relu(x, gamma, beta):
    mean = jnp.mean(x, axis=(0, 2), keepdims=True)
    var = jnp.mean((x - mean) ** 2, axis=(0, 2), keepdims=True)      # biased (training) var
    y = (x - mean) * lax.rsqrt(var + 1e-5)
    return jnp.maximum(y * gamma[None, :, None] + beta[None, :, None], 0.0)


def cvae_forward_ref(params, x, y, eps):
    del y
    h = x
    for (w, b, gamma, beta) in params["enc_convs"]:
        h = _ref_bn_relu(_ref_conv1d(h, w, b, ENC_PAD), gamma, beta)
    B = h.shape[0]
    latent = h.reshape(B, -1) @ params["enc_lin_w"] + params["enc_lin_b"]
    mean = latent[:, :LATENT_DIM]
    log_var = latent[:, LATENT_DIM:]
    z = mean + eps * jnp.exp(0.5 * log_var)
    d = (z @ params["dec_lin_w"] + params["dec_lin_b"]).reshape(B, LAST_FILTER_SIZE, LAST_FEATURE_SIZE)
    nb = len(params["dec_convs"])
    for i, (w, b) in enumerate(params["dec_convs"]):
        pad = ENC_PAD + 1 if i == nb - 1 else ENC_PAD
        d = _ref_convtr1d(d, w, b, pad)
    return d, mean, log_var


# ---------------- main ----------------

if __name__ == "__main__":
    key = jax.random.PRNGKey(0)
    key, kp, kx, ke = jax.random.split(key, 4)

    params = init_params(kp)
    prepped = prepare_params(params)      # one-time weight/layout precompute (outside jit)

    B = 2
    x = jax.random.normal(kx, (B, IN_CHANNELS, SEQ_LEN), jnp.float32)
    y = jnp.zeros((B, 1), jnp.float32)                     # conditioning input (unused by reference forward)
    eps = jax.random.normal(ke, (B, LATENT_DIM), jnp.float32)

    fwd = jax.jit(cvae_forward)
    x_rec, mean, log_var = fwd(prepped, x, y, eps)
    jax.block_until_ready((x_rec, mean, log_var))

    assert x_rec.shape == (B, IN_CHANNELS, SEQ_LEN), x_rec.shape
    assert mean.shape == (B, LATENT_DIM), mean.shape
    assert log_var.shape == (B, LATENT_DIM), log_var.shape
    assert bool(jnp.all(jnp.isfinite(x_rec)))

    # sanity check against a pure-JAX reference of the same forward pass
    xr_ref, m_ref, lv_ref = jax.jit(cvae_forward_ref)(params, x, y, eps)
    assert bool(jnp.allclose(mean, m_ref, atol=5e-2, rtol=5e-2))
    assert bool(jnp.allclose(log_var, lv_ref, atol=5e-2, rtol=5e-2))
    assert bool(jnp.allclose(x_rec, xr_ref, atol=5e-2, rtol=5e-2))

    print("KERNEL_OK")
</pallas_src>

<mosaic_0001>
module attributes {stable_mosaic.version = 11 : i64} {
  func.func @kernel(%arg0: memref<2x180xf32, #tpu.memory_space<vmem>>, %arg1: memref<2x8xf32, #tpu.memory_space<vmem>>, %arg2: memref<180x112xf32, #tpu.memory_space<vmem>>, %arg3: memref<112x112xf32, #tpu.memory_space<vmem>>, %arg4: memref<1x112xf32, #tpu.memory_space<vmem>>, %arg5: memref<1x112xf32, #tpu.memory_space<vmem>>, %arg6: memref<112x40xf32, #tpu.memory_space<vmem>>, %arg7: memref<40x40xf32, #tpu.memory_space<vmem>>, %arg8: memref<1x40xf32, #tpu.memory_space<vmem>>, %arg9: memref<1x40xf32, #tpu.memory_space<vmem>>, %arg10: memref<40x12xf32, #tpu.memory_space<vmem>>, %arg11: memref<12x12xf32, #tpu.memory_space<vmem>>, %arg12: memref<1x12xf32, #tpu.memory_space<vmem>>, %arg13: memref<1x12xf32, #tpu.memory_space<vmem>>, %arg14: memref<12x8xf32, #tpu.memory_space<vmem>>, %arg15: memref<1x8xf32, #tpu.memory_space<vmem>>, %arg16: memref<12x8xf32, #tpu.memory_space<vmem>>, %arg17: memref<1x8xf32, #tpu.memory_space<vmem>>, %arg18: memref<8x180xf32, #tpu.memory_space<vmem>>, %arg19: memref<1x180xf32, #tpu.memory_space<vmem>>, %arg20: memref<2x180xf32, #tpu.memory_space<vmem>>, %arg21: memref<2x8xf32, #tpu.memory_space<vmem>>, %arg22: memref<2x8xf32, #tpu.memory_space<vmem>>) attributes {dimension_semantics = [], scalar_prefetch = 0 : i64, scratch_operands = 0 : i64, tpu.core_type = #tpu.core_type<tc>} {
    %c0 = arith.constant 0 : index
    %c0_0 = arith.constant 0 : index
    %0 = vector.load %arg0[%c0, %c0_0] : memref<2x180xf32, #tpu.memory_space<vmem>>, vector<2x180xf32>
    %c0_1 = arith.constant 0 : index
    %c0_2 = arith.constant 0 : index
    %1 = vector.load %arg2[%c0_1, %c0_2] : memref<180x112xf32, #tpu.memory_space<vmem>>, vector<180x112xf32>
    %cst = arith.constant dense<0.000000e+00> : vector<2x112xf32>
    %2 = tpu.matmul %0, %1, %cst {dimension_numbers = #tpu.dot_dimension_numbers<[1], [0], [0], [1], [0, 0, 1, 1], [], []>} : vector<2x180xf32>, vector<180x112xf32>, vector<2x112xf32> -> vector<2x112xf32>
    %cst_3 = arith.constant dense<0.000000e+00> : vector<112xf32>
    %3 = vector.multi_reduction <add>, %2, %cst_3 [0] : vector<2x112xf32> to vector<112xf32>
    %4 = vector.shape_cast %3 : vector<112xf32> to vector<1x112xf32>
    %c0_4 = arith.constant 0 : index
    %c0_5 = arith.constant 0 : index
    %5 = vector.load %arg3[%c0_4, %c0_5] : memref<112x112xf32, #tpu.memory_space<vmem>>, vector<112x112xf32>
    %cst_6 = arith.constant dense<0.000000e+00> : vector<1x112xf32>
    %6 = tpu.matmul %4, %5, %cst_6 {dimension_numbers = #tpu.dot_dimension_numbers<[1], [0], [0], [1], [0, 0, 1, 1], [], []>} : vector<1x112xf32>, vector<112x112xf32>, vector<1x112xf32> -> vector<1x112xf32>
    %cst_7 = arith.constant 0.0714285746 : f32
    %7 = vector.broadcast %cst_7 : f32 to vector<1x112xf32>
    %8 = arith.mulf %6, %7 : vector<1x112xf32>
    %9 = vector.broadcast %8 : vector<1x112xf32> to vector<2x112xf32>
    %10 = arith.subf %2, %9 : vector<2x112xf32>
    %11 = arith.mulf %10, %10 : vector<2x112xf32>
    %cst_8 = arith.constant dense<0.000000e+00> : vector<112xf32>
    %12 = vector.multi_reduction <add>, %11, %cst_8 [0] : vector<2x112xf32> to vector<112xf32>
    %13 = vector.shape_cast %12 : vector<112xf32> to vector<1x112xf32>
    %c0_9 = arith.constant 0 : index
    %c0_10 = arith.constant 0 : index
    %14 = vector.load %arg3[%c0_9, %c0_10] : memref<112x112xf32, #tpu.memory_space<vmem>>, vector<112x112xf32>
    %cst_11 = arith.constant dense<0.000000e+00> : vector<1x112xf32>
    %15 = tpu.matmul %13, %14, %cst_11 {dimension_numbers = #tpu.dot_dimension_numbers<[1], [0], [0], [1], [0, 0, 1, 1], [], []>} : vector<1x112xf32>, vector<112x112xf32>, vector<1x112xf32> -> vector<1x112xf32>
    %cst_12 = arith.constant 0.0714285746 : f32
    %16 = vector.broadcast %cst_12 : f32 to vector<1x112xf32>
    %17 = arith.mulf %15, %16 : vector<1x112xf32>
    %c0_13 = arith.constant 0 : index
    %c0_14 = arith.constant 0 : index
    %18 = vector.load %arg4[%c0_13, %c0_14] : memref<1x112xf32, #tpu.memory_space<vmem>>, vector<1x112xf32>
    %cst_15 = arith.constant 9.99999974E-6 : f32
    %19 = vector.broadcast %cst_15 : f32 to vector<1x112xf32>
    %20 = arith.addf %17, %19 : vector<1x112xf32>
    %21 = math.rsqrt %20 : vector<1x112xf32>
    %22 = arith.mulf %18, %21 : vector<1x112xf32>
    %23 = vector.broadcast %22 : vector<1x112xf32> to vector<2x112xf32>
    %24 = arith.mulf %10, %23 : vector<2x112xf32>
    %c0_16 = arith.constant 0 : index
    %c0_17 = arith.constant 0 : index
    %25 = vector.load %arg5[%c0_16, %c0_17] : memref<1x112xf32, #tpu.memory_space<vmem>>, vector<1x112xf32>
    %26 = vector.broadcast %25 : vector<1x112xf32> to vector<2x112xf32>
    %27 = arith.addf %24, %26 : vector<2x112xf32>
    %cst_18 = arith.constant 0.000000e+00 : f32
    %28 = vector.broadcast %cst_18 : f32 to vector<2x112xf32>
    %29 = arith.maximumf %27, %28 : vector<2x112xf32>
    %c0_19 = arith.constant 0 : index
    %c0_20 = arith.constant 0 : index
    %30 = vector.load %arg6[%c0_19, %c0_20] : memref<112x40xf32, #tpu.memory_space<vmem>>, vector<112x40xf32>
    %cst_21 = arith.constant dense<0.000000e+00> : vector<2x40xf32>
    %31 = tpu.matmul %29, %30, %cst_21 {dimension_numbers = #tpu.dot_dimension_numbers<[1], [0], [0], [1], [0, 0, 1, 1], [], []>} : vector<2x112xf32>, vector<112x40xf32>, vector<2x40xf32> -> vector<2x40xf32>
    %cst_22 = arith.constant dense<0.000000e+00> : vector<40xf32>
    %32 = vector.multi_reduction <add>, %31, %cst_22 [0] : vector<2x40xf32> to vector<40xf32>
    %33 = vector.shape_cast %32 : vector<40xf32> to vector<1x40xf32>
    %c0_23 = arith.constant 0 : index
    %c0_24 = arith.constant 0 : index
    %34 = vector.load %arg7[%c0_23, %c0_24] : memref<40x40xf32, #tpu.memory_space<vmem>>, vector<40x40xf32>
    %cst_25 = arith.constant dense<0.000000e+00> : vector<1x40xf32>
    %35 = tpu.matmul %33, %34, %cst_25 {dimension_numbers = #tpu.dot_dimension_numbers<[1], [0], [0], [1], [0, 0, 1, 1], [], []>} : vector<1x40xf32>, vector<40x40xf32>, vector<1x40xf32> -> vector<1x40xf32>
    %cst_26 = arith.constant 1.000000e-01 : f32
    %36 = vector.broadcast %cst_26 : f32 to vector<1x40xf32>
    %37 = arith.mulf %35, %36 : vector<1x40xf32>
    %38 = vector.broadcast %37 : vector<1x40xf32> to vector<2x40xf32>
    %39 = arith.subf %31, %38 : vector<2x40xf32>
    %40 = arith.mulf %39, %39 : vector<2x40xf32>
    %cst_27 = arith.constant dense<0.000000e+00> : vector<40xf32>
    %41 = vector.multi_reduction <add>, %40, %cst_27 [0] : vector<2x40xf32> to vector<40xf32>
    %42 = vector.shape_cast %41 : vector<40xf32> to vector<1x40xf32>
    %c0_28 = arith.constant 0 : index
    %c0_29 = arith.constant 0 : index
    %43 = vector.load %arg7[%c0_28, %c0_29] : memref<40x40xf32, #tpu.memory_space<vmem>>, vector<40x40xf32>
    %cst_30 = arith.constant dense<0.000000e+00> : vector<1x40xf32>
    %44 = tpu.matmul %42, %43, %cst_30 {dimension_numbers = #tpu.dot_dimension_numbers<[1], [0], [0], [1], [0, 0, 1, 1], [], []>} : vector<1x40xf32>, vector<40x40xf32>, vector<1x40xf32> -> vector<1x40xf32>
    %cst_31 = arith.constant 1.000000e-01 : f32
    %45 = vector.broadcast %cst_31 : f32 to vector<1x40xf32>
    %46 = arith.mulf %44, %45 : vector<1x40xf32>
    %c0_32 = arith.constant 0 : index
    %c0_33 = arith.constant 0 : index
    %47 = vector.load %arg8[%c0_32, %c0_33] : memref<1x40xf32, #tpu.memory_space<vmem>>, vector<1x40xf32>
    %cst_34 = arith.constant 9.99999974E-6 : f32
    %48 = vector.broadcast %cst_34 : f32 to vector<1x40xf32>
    %49 = arith.addf %46, %48 : vector<1x40xf32>
    %50 = math.rsqrt %49 : vector<1x40xf32>
    %51 = arith.mulf %47, %50 : vector<1x40xf32>
    %52 = vector.broadcast %51 : vector<1x40xf32> to vector<2x40xf32>
    %53 = arith.mulf %39, %52 : vector<2x40xf32>
    %c0_35 = arith.constant 0 : index
    %c0_36 = arith.constant 0 : index
    %54 = vector.load %arg9[%c0_35, %c0_36] : memref<1x40xf32, #tpu.memory_space<vmem>>, vector<1x40xf32>
    %55 = vector.broadcast %54 : vector<1x40xf32> to vector<2x40xf32>
    %56 = arith.addf %53, %55 : vector<2x40xf32>
    %cst_37 = arith.constant 0.000000e+00 : f32
    %57 = vector.broadcast %cst_37 : f32 to vector<2x40xf32>
    %58 = arith.maximumf %56, %57 : vector<2x40xf32>
    %c0_38 = arith.constant 0 : index
    %c0_39 = arith.constant 0 : index
    %59 = vector.load %arg10[%c0_38, %c0_39] : memref<40x12xf32, #tpu.memory_space<vmem>>, vector<40x12xf32>
    %cst_40 = arith.constant dense<0.000000e+00> : vector<2x12xf32>
    %60 = tpu.matmul %58, %59, %cst_40 {dimension_numbers = #tpu.dot_dimension_numbers<[1], [0], [0], [1], [0, 0, 1, 1], [], []>} : vector<2x40xf32>, vector<40x12xf32>, vector<2x12xf32> -> vector<2x12xf32>
    %cst_41 = arith.constant dense<0.000000e+00> : vector<12xf32>
    %61 = vector.multi_reduction <add>, %60, %cst_41 [0] : vector<2x12xf32> to vector<12xf32>
    %62 = vector.shape_cast %61 : vector<12xf32> to vector<1x12xf32>
    %c0_42 = arith.constant 0 : index
    %c0_43 = arith.constant 0 : index
    %63 = vector.load %arg11[%c0_42, %c0_43] : memref<12x12xf32, #tpu.memory_space<vmem>>, vector<12x12xf32>
    %cst_44 = arith.constant dense<0.000000e+00> : vector<1x12xf32>
    %64 = tpu.matmul %62, %63, %cst_44 {dimension_numbers = #tpu.dot_dimension_numbers<[1], [0], [0], [1], [0, 0, 1, 1], [], []>} : vector<1x12xf32>, vector<12x12xf32>, vector<1x12xf32> -> vector<1x12xf32>
    %cst_45 = arith.constant 0.166666672 : f32
    %65 = vector.broadcast %cst_45 : f32 to vector<1x12xf32>
    %66 = arith.mulf %64, %65 : vector<1x12xf32>
    %67 = vector.broadcast %66 : vector<1x12xf32> to vector<2x12xf32>
    %68 = arith.subf %60, %67 : vector<2x12xf32>
    %69 = arith.mulf %68, %68 : vector<2x12xf32>
    %cst_46 = arith.constant dense<0.000000e+00> : vector<12xf32>
    %70 = vector.multi_reduction <add>, %69, %cst_46 [0] : vector<2x12xf32> to vector<12xf32>
    %71 = vector.shape_cast %70 : vector<12xf32> to vector<1x12xf32>
    %c0_47 = arith.constant 0 : index
    %c0_48 = arith.constant 0 : index
    %72 = vector.load %arg11[%c0_47, %c0_48] : memref<12x12xf32, #tpu.memory_space<vmem>>, vector<12x12xf32>
    %cst_49 = arith.constant dense<0.000000e+00> : vector<1x12xf32>
    %73 = tpu.matmul %71, %72, %cst_49 {dimension_numbers = #tpu.dot_dimension_numbers<[1], [0], [0], [1], [0, 0, 1, 1], [], []>} : vector<1x12xf32>, vector<12x12xf32>, vector<1x12xf32> -> vector<1x12xf32>
    %cst_50 = arith.constant 0.166666672 : f32
    %74 = vector.broadcast %cst_50 : f32 to vector<1x12xf32>
    %75 = arith.mulf %73, %74 : vector<1x12xf32>
    %c0_51 = arith.constant 0 : index
    %c0_52 = arith.constant 0 : index
    %76 = vector.load %arg12[%c0_51, %c0_52] : memref<1x12xf32, #tpu.memory_space<vmem>>, vector<1x12xf32>
    %cst_53 = arith.constant 9.99999974E-6 : f32
    %77 = vector.broadcast %cst_53 : f32 to vector<1x12xf32>
    %78 = arith.addf %75, %77 : vector<1x12xf32>
    %79 = math.rsqrt %78 : vector<1x12xf32>
    %80 = arith.mulf %76, %79 : vector<1x12xf32>
    %81 = vector.broadcast %80 : vector<1x12xf32> to vector<2x12xf32>
    %82 = arith.mulf %68, %81 : vector<2x12xf32>
    %c0_54 = arith.constant 0 : index
    %c0_55 = arith.constant 0 : index
    %83 = vector.load %arg13[%c0_54, %c0_55] : memref<1x12xf32, #tpu.memory_space<vmem>>, vector<1x12xf32>
    %84 = vector.broadcast %83 : vector<1x12xf32> to vector<2x12xf32>
    %85 = arith.addf %82, %84 : vector<2x12xf32>
    %cst_56 = arith.constant 0.000000e+00 : f32
    %86 = vector.broadcast %cst_56 : f32 to vector<2x12xf32>
    %87 = arith.maximumf %85, %86 : vector<2x12xf32>
    %c0_57 = arith.constant 0 : index
    %c0_58 = arith.constant 0 : index
    %88 = vector.load %arg14[%c0_57, %c0_58] : memref<12x8xf32, #tpu.memory_space<vmem>>, vector<12x8xf32>
    %cst_59 = arith.constant dense<0.000000e+00> : vector<2x8xf32>
    %89 = tpu.matmul %87, %88, %cst_59 {dimension_numbers = #tpu.dot_dimension_numbers<[1], [0], [0], [1], [0, 0, 1, 1], [], []>} : vector<2x12xf32>, vector<12x8xf32>, vector<2x8xf32> -> vector<2x8xf32>
    %c0_60 = arith.constant 0 : index
    %c0_61 = arith.constant 0 : index
    %90 = vector.load %arg15[%c0_60, %c0_61] : memref<1x8xf32, #tpu.memory_space<vmem>>, vector<1x8xf32>
    %91 = vector.broadcast %90 : vector<1x8xf32> to vector<2x8xf32>
    %92 = arith.addf %89, %91 : vector<2x8xf32>
    %c0_62 = arith.constant 0 : index
    %c0_63 = arith.constant 0 : index
    %93 = vector.load %arg16[%c0_62, %c0_63] : memref<12x8xf32, #tpu.memory_space<vmem>>, vector<12x8xf32>
    %cst_64 = arith.constant dense<0.000000e+00> : vector<2x8xf32>
    %94 = tpu.matmul %87, %93, %cst_64 {dimension_numbers = #tpu.dot_dimension_numbers<[1], [0], [0], [1], [0, 0, 1, 1], [], []>} : vector<2x12xf32>, vector<12x8xf32>, vector<2x8xf32> -> vector<2x8xf32>
    %c0_65 = arith.constant 0 : index
    %c0_66 = arith.constant 0 : index
    %95 = vector.load %arg17[%c0_65, %c0_66] : memref<1x8xf32, #tpu.memory_space<vmem>>, vector<1x8xf32>
    %96 = vector.broadcast %95 : vector<1x8xf32> to vector<2x8xf32>
    %97 = arith.addf %94, %96 : vector<2x8xf32>
    %c0_67 = arith.constant 0 : index
    %c0_68 = arith.constant 0 : index
    %98 = vector.load %arg1[%c0_67, %c0_68] : memref<2x8xf32, #tpu.memory_space<vmem>>, vector<2x8xf32>
    %cst_69 = arith.constant 5.000000e-01 : f32
    %99 = vector.broadcast %cst_69 : f32 to vector<2x8xf32>
    %100 = arith.mulf %97, %99 : vector<2x8xf32>
    %101 = math.exp %100 : vector<2x8xf32>
    %102 = arith.mulf %98, %101 : vector<2x8xf32>
    %103 = arith.addf %92, %102 : vector<2x8xf32>
    %c0_70 = arith.constant 0 : index
    %c0_71 = arith.constant 0 : index
    %104 = vector.load %arg18[%c0_70, %c0_71] : memref<8x180xf32, #tpu.memory_space<vmem>>, vector<8x180xf32>
    %cst_72 = arith.constant dense<0.000000e+00> : vector<2x180xf32>
    %105 = tpu.matmul %103, %104, %cst_72 {dimension_numbers = #tpu.dot_dimension_numbers<[1], [0], [0], [1], [0, 0, 1, 1], [], []>} : vector<2x8xf32>, vector<8x180xf32>, vector<2x180xf32> -> vector<2x180xf32>
    %c0_73 = arith.constant 0 : index
    %c0_74 = arith.constant 0 : index
    %106 = vector.load %arg19[%c0_73, %c0_74] : memref<1x180xf32, #tpu.memory_space<vmem>>, vector<1x180xf32>
    %107 = vector.broadcast %106 : vector<1x180xf32> to vector<2x180xf32>
    %108 = arith.addf %105, %107 : vector<2x180xf32>
    %c0_75 = arith.constant 0 : index
    %c0_76 = arith.constant 0 : index
    %109 = vector.load %arg20[%c0_75, %c0_76] : memref<2x180xf32, #tpu.memory_space<vmem>>, vector<2x180xf32>
    tpu.vector_store %arg20[%c0_75, %c0_76], %108 {strides = array<i32>} : memref<2x180xf32, #tpu.memory_space<vmem>>, vector<2x180xf32>,
    %c0_77 = arith.constant 0 : index
    %c0_78 = arith.constant 0 : index
    %110 = vector.load %arg21[%c0_77, %c0_78] : memref<2x8xf32, #tpu.memory_space<vmem>>, vector<2x8xf32>
    tpu.vector_store %arg21[%c0_77, %c0_78], %92 {strides = array<i32>} : memref<2x8xf32, #tpu.memory_space<vmem>>, vector<2x8xf32>,
    %c0_79 = arith.constant 0 : index
    %c0_80 = arith.constant 0 : index
    %111 = vector.load %arg22[%c0_79, %c0_80] : memref<2x8xf32, #tpu.memory_space<vmem>>, vector<2x8xf32>
    tpu.vector_store %arg22[%c0_79, %c0_80], %97 {strides = array<i32>} : memref<2x8xf32, #tpu.memory_space<vmem>>, vector<2x8xf32>,
    return
  }
}

</mosaic_0001>

<llo_original>
// kernel: cvae_forward.1
$region0: #{cvae_forward.1}
  #allocation0 [shape = 'u32[]', space=smem, size = 0x4, offset = 0x4, fixed_abs, tag = 'smem constant byte address 0x4 - core index']
  #allocation1 [shape = 'u32[144,128]{1,0:T(1,128)}', space=vmem, size = 0x12000, scoped, tag = 'internal scratch']
  %s0 = inlined_call_operand.vmem [shape: f32[2,180], index: 0, kind: input, shape index: {}]
  %s1 = inlined_call_operand.vmem [shape: f32[2,8], index: 1, kind: input, shape index: {}]
  %s2 = inlined_call_operand.vmem [shape: f32[180,112], index: 2, kind: input, shape index: {}]
  %s3 = inlined_call_operand.vmem [shape: f32[112,112], index: 3, kind: input, shape index: {}]
  %s4 = inlined_call_operand.hbm [shape: f32[1,112], index: 4, kind: input, shape index: {}]
  %s5 = inlined_call_operand.hbm [shape: f32[1,112], index: 5, kind: input, shape index: {}]
  %s6 = inlined_call_operand.vmem [shape: f32[112,40], index: 6, kind: input, shape index: {}]
  %s7 = inlined_call_operand.vmem [shape: f32[40,40], index: 7, kind: input, shape index: {}]
  %s8 = inlined_call_operand.hbm [shape: f32[1,40], index: 8, kind: input, shape index: {}]
  %s9 = inlined_call_operand.hbm [shape: f32[1,40], index: 9, kind: input, shape index: {}]
  %s10 = inlined_call_operand.vmem [shape: f32[40,12], index: 10, kind: input, shape index: {}]
  %s11 = inlined_call_operand.hbm [shape: f32[12,12], index: 11, kind: input, shape index: {}]
  %s12 = inlined_call_operand.hbm [shape: f32[1,12], index: 12, kind: input, shape index: {}]
  %s13 = inlined_call_operand.hbm [shape: f32[1,12], index: 13, kind: input, shape index: {}]
  %s14 = inlined_call_operand.vmem [shape: f32[12,8], index: 14, kind: input, shape index: {}]
  %s15 = inlined_call_operand.hbm [shape: f32[1,8], index: 15, kind: input, shape index: {}]
  %s16 = inlined_call_operand.vmem [shape: f32[12,8], index: 16, kind: input, shape index: {}]
  %s17 = inlined_call_operand.hbm [shape: f32[1,8], index: 17, kind: input, shape index: {}]
  %s18 = inlined_call_operand.vmem [shape: f32[8,180], index: 18, kind: input, shape index: {}]
  %s19 = inlined_call_operand.vmem [shape: f32[1,180], index: 19, kind: input, shape index: {}]
  %s20 = inlined_call_operand.vmem [shape: f32[2,180], index: 20, kind: output, shape index: {0}]
  %s21 = inlined_call_operand.hbm [shape: f32[2,8], index: 21, kind: output, shape index: {1}]
  %s22 = inlined_call_operand.hbm [shape: f32[2,8], index: 22, kind: output, shape index: {2}]
  %23 = xla_tuple %s20, %s21, %s22
  %s24 = sld [smem:[#allocation0]]
  $region142: #{cvae_forward.1} parent=0
    _
  %s26 = ssub.s32 1, %s24
  %s27 = scalar_select 0, %s26, %s24
  $region1: #{cvae_forward.1} parent=0
    #allocation2 [shape = 'u8[512]{0}', space=vmem, size = 0x400, scoped, tag = 'input window, operand 4, single buffered']
    #allocation3 [shape = 's32[1]{0}', space=sflag, size = 0x4, scoped, tag = 'scoped memory for cvae_forward.1']
    #allocation4 [shape = 's32[1]{0}', space=sflag, size = 0x4, scoped, tag = 'scoped memory for cvae_forward.1']
    #allocation5 [shape = 'u8[512]{0}', space=vmem, size = 0x400, scoped, tag = 'input window, operand 5, single buffered']
    #allocation6 [shape = 's32[1]{0}', space=sflag, size = 0x4, scoped, tag = 'scoped memory for cvae_forward.1']
    #allocation7 [shape = 'u8[512]{0}', space=vmem, size = 0x400, scoped, tag = 'input window, operand 8, single buffered']
    #allocation8 [shape = 'u8[512]{0}', space=vmem, size = 0x400, scoped, tag = 'input window, operand 9, single buffered']
    #allocation9 [shape = 's32[1]{0}', space=sflag, size = 0x4, scoped, tag = 'scoped memory for cvae_forward.1']
    #allocation10 [shape = 'u8[8192]{0}', space=vmem, size = 0x2000, scoped, tag = 'input window, operand 11, single buffered']
    #allocation11 [shape = 'u8[512]{0}', space=vmem, size = 0x400, scoped, tag = 'input window, operand 12, single buffered']
    #allocation12 [shape = 's32[1]{0}', space=sflag, size = 0x4, scoped, tag = 'scoped memory for cvae_forward.1']
    #allocation13 [shape = 'u8[512]{0}', space=vmem, size = 0x400, scoped, tag = 'input window, operand 13, single buffered']
    #allocation14 [shape = 'u8[512]{0}', space=vmem, size = 0x400, scoped, tag = 'input window, operand 15, single buffered']
    #allocation15 [shape = 's32[1]{0}', space=sflag, size = 0x4, scoped, tag = 'scoped memory for cvae_forward.1']
    #allocation16 [shape = 'u8[512]{0}', space=vmem, size = 0x400, scoped, tag = 'input window, operand 17, single buffered']
    #allocation17 [shape = 'u8[1024]{0}', space=vmem, size = 0x400, scoped, tag = 'output window, operand 1, single buffered']
    #allocation18 [shape = 'u8[1024]{0}', space=vmem, size = 0x400, scoped, tag = 'output window, operand 2, single buffered']
    #allocation19 [shape = 's32[1]{0}', space=sflag, size = 0x4, scoped, tag = 'scoped memory for cvae_forward.1']
    %28 = vsyncpa [#allocation3], 0
    %29 = vsyncpa [#allocation6], 0
    %30 = vsyncpa [#allocation9], 0
    %31 = vsyncpa [#allocation12], 0
    %32 = vsyncpa [#allocation15], 0
    %33 = vsyncpa [#allocation4], 0
    %34 = vsyncpa [#allocation19], 0
    // Predicated region
    $region2: #{cvae_forward.1} parent=1 // pred_check
      _
    $region3: #{cvae_forward.1} parent=1 // pred_check_branch
      %36 = sbr.rel (0) target = $region5
    $region4: #{cvae_forward.1} parent=1 // pred_region
      _
    $region5: #{cvae_forward.1} parent=1 // pred_fallthru
      _
    // Predicated region
    $region6: #{cvae_forward.1} parent=1 // pred_check
      _
    $region7: #{cvae_forward.1} parent=1 // pred_check_branch
      %38 = sbr.rel (0) target = $region9
    $region8: #{cvae_forward.1} parent=1 // pred_region
      _
    $region9: #{cvae_forward.1} parent=1 // pred_fallthru
      _
    // Predicated region
    $region10: #{cvae_forward.1} parent=1 // pred_check
      _
    $region11: #{cvae_forward.1} parent=1 // pred_check_branch
      %40 = sbr.rel (0) target = $region13
    $region12: #{cvae_forward.1} parent=1 // pred_region
      _
    $region13: #{cvae_forward.1} parent=1 // pred_fallthru
      _
    // Predicated region
    $region14: #{cvae_forward.1} parent=1 // pred_check
      _
    $region15: #{cvae_forward.1} parent=1 // pred_check_branch
      %42 = sbr.rel (0) target = $region17
    $region16: #{cvae_forward.1} parent=1 // pred_region
      _
    $region17: #{cvae_forward.1} parent=1 // pred_fallthru
      _
    // Predicated region
    $region18: #{cvae_forward.1} parent=1 // pred_check
      _
    $region19: #{cvae_forward.1} parent=1 // pred_check_branch
      %44 = sbr.rel (0) target = $region21
    $region20: #{cvae_forward.1} parent=1 // pred_region
      %s46 = ssub.s32 16, 16
      %47 = vsyncadd [#allocation3], %s46
      %s49 = sshll.u32 [#allocation2], 4
      %s50 = int_to_ptr.vmem [resolvable:$true] %s49
      %52 = dma.hbm_to_vmem [thread:$0]  %s4, 16, %s50, [#allocation3]
    $region21: #{cvae_forward.1} parent=1 // pred_fallthru
      _
    // Predicated region
    $region22: #{cvae_forward.1} parent=1 // pred_check
      _
    $region23: #{cvae_forward.1} parent=1 // pred_check_branch
      %54 = sbr.rel (0) target = $region25
    $region24: #{cvae_forward.1} parent=1 // pred_region
      %s56 = ssub.s32 16, 16
      %57 = vsyncadd [#allocation6], %s56
      %s59 = sshll.u32 [#allocation5], 4
      %s60 = int_to_ptr.vmem [resolvable:$true] %s59
      %62 = dma.hbm_to_vmem [thread:$0]  %s5, 16, %s60, [#allocation6]
    $region25: #{cvae_forward.1} parent=1 // pred_fallthru
      _
    // Predicated region
    $region26: #{cvae_forward.1} parent=1 // pred_check
      _
    $region27: #{cvae_forward.1} parent=1 // pred_check_branch
      %64 = sbr.rel (0) target = $region29
    $region28: #{cvae_forward.1} parent=1 // pred_region
      _
    $region29: #{cvae_forward.1} parent=1 // pred_fallthru
      _
    // Predicated region
    $region30: #{cvae_forward.1} parent=1 // pred_check
      _
    $region31: #{cvae_forward.1} parent=1 // pred_check_branch
      %66 = sbr.rel (0) target = $region33
    $region32: #{cvae_forward.1} parent=1 // pred_region
      _
    $region33: #{cvae_forward.1} parent=1 // pred_fallthru
      _
    // Predicated region
    $region34: #{cvae_forward.1} parent=1 // pred_check
      _
    $region35: #{cvae_forward.1} parent=1 // pred_check_branch
      %68 = sbr.rel (0) target = $region37
    $region36: #{cvae_forward.1} parent=1 // pred_region
      %s70 = ssub.s32 16, 16
      %71 = vsyncadd [#allocation6], %s70
      %s73 = sshll.u32 [#allocation7], 4
      %s74 = int_to_ptr.vmem [resolvable:$true] %s73
      %76 = dma.hbm_to_vmem [thread:$0]  %s8, 16, %s74, [#allocation6]
    $region37: #{cvae_forward.1} parent=1 // pred_fallthru
      _
    // Predicated region
    $region38: #{cvae_forward.1} parent=1 // pred_check
      _
    $region39: #{cvae_forward.1} parent=1 // pred_check_branch
      %78 = sbr.rel (0) target = $region41
    $region40: #{cvae_forward.1} parent=1 // pred_region
      %s80 = ssub.s32 16, 16
      %81 = vsyncadd [#allocation9], %s80
      %s83 = sshll.u32 [#allocation8], 4
      %s84 = int_to_ptr.vmem [resolvable:$true] %s83
      %86 = dma.hbm_to_vmem [thread:$0]  %s9, 16, %s84, [#allocation9]
    $region41: #{cvae_forward.1} parent=1 // pred_fallthru
      _
    // Predicated region
    $region42: #{cvae_forward.1} parent=1 // pred_check
      _
    $region43: #{cvae_forward.1} parent=1 // pred_check_branch
      %88 = sbr.rel (0) target = $region45
    $region44: #{cvae_forward.1} parent=1 // pred_region
      _
    $region45: #{cvae_forward.1} parent=1 // pred_fallthru
      _
    // Predicated region
    $region46: #{cvae_forward.1} parent=1 // pred_check
      _
    $region47: #{cvae_forward.1} parent=1 // pred_check_branch
      %90 = sbr.rel (0) target = $region49
    $region48: #{cvae_forward.1} parent=1 // pred_region
      %s92 = ssub.s32 256, 256
      %93 = vsyncadd [#allocation9], %s92
      %s94 = sshll.u32 [#allocation10], 4
      %s95 = int_to_ptr.vmem [resolvable:$true] %s94
      %100 = dma.hbm_to_vmem [thread:$0]  %s11, 256, %s95, [#allocation9], 128, 128, 8
    $region49: #{cvae_forward.1} parent=1 // pred_fallthru
      _
    // Predicated region
    $region50: #{cvae_forward.1} parent=1 // pred_check
      _
    $region51: #{cvae_forward.1} parent=1 // pred_check_branch
      %102 = sbr.rel (0) target = $region53
    $region52: #{cvae_forward.1} parent=1 // pred_region
      %s104 = ssub.s32 16, 16
      %105 = vsyncadd [#allocation12], %s104
      %s107 = sshll.u32 [#allocation11], 4
      %s108 = int_to_ptr.vmem [resolvable:$true] %s107
      %110 = dma.hbm_to_vmem [thread:$0]  %s12, 16, %s108, [#allocation12]
    $region53: #{cvae_forward.1} parent=1 // pred_fallthru
      _
    // Predicated region
    $region54: #{cvae_forward.1} parent=1 // pred_check
      _
    $region55: #{cvae_forward.1} parent=1 // pred_check_branch
      %112 = sbr.rel (0) target = $region57
    $region56: #{cvae_forward.1} parent=1 // pred_region
      %s114 = ssub.s32 16, 16
      %115 = vsyncadd [#allocation12], %s114
      %s117 = sshll.u32 [#allocation13], 4
      %s118 = int_to_ptr.vmem [resolvable:$true] %s117
      %120 = dma.hbm_to_vmem [thread:$0]  %s13, 16, %s118, [#allocation12]
    $region57: #{cvae_forward.1} parent=1 // pred_fallthru
      _
    // Predicated region
    $region58: #{cvae_forward.1} parent=1 // pred_check
      _
    $region59: #{cvae_forward.1} parent=1 // pred_check_branch
      %122 = sbr.rel (0) target = $region61
    $region60: #{cvae_forward.1} parent=1 // pred_region
      _
    $region61: #{cvae_forward.1} parent=1 // pred_fallthru
      _
    // Predicated region
    $region62: #{cvae_forward.1} parent=1 // pred_check
      _
    $region63: #{cvae_forward.1} parent=1 // pred_check_branch
      %124 = sbr.rel (0) target = $region65
    $region64: #{cvae_forward.1} parent=1 // pred_region
      %s126 = ssub.s32 16, 16
      %127 = vsyncadd [#allocation15], %s126
      %s129 = sshll.u32 [#allocation14], 4
      %s130 = int_to_ptr.vmem [resolvable:$true] %s129
      %132 = dma.hbm_to_vmem [thread:$0]  %s15, 16, %s130, [#allocation15]
    $region65: #{cvae_forward.1} parent=1 // pred_fallthru
      _
    // Predicated region
    $region66: #{cvae_forward.1} parent=1 // pred_check
      _
    $region67: #{cvae_forward.1} parent=1 // pred_check_branch
      %134 = sbr.rel (0) target = $region69
    $region68: #{cvae_forward.1} parent=1 // pred_region
      _
    $region69: #{cvae_forward.1} parent=1 // pred_fallthru
      _
    // Predicated region
    $region70: #{cvae_forward.1} parent=1 // pred_check
      _
    $region71: #{cvae_forward.1} parent=1 // pred_check_branch
      %136 = sbr.rel (0) target = $region73
    $region72: #{cvae_forward.1} parent=1 // pred_region
      %s138 = ssub.s32 16, 16
      %139 = vsyncadd [#allocation15], %s138
      %s141 = sshll.u32 [#allocation16], 4
      %s142 = int_to_ptr.vmem [resolvable:$true] %s141
      %144 = dma.hbm_to_vmem [thread:$0]  %s17, 16, %s142, [#allocation15]
    $region73: #{cvae_forward.1} parent=1 // pred_fallthru
      _
    // Predicated region
    $region74: #{cvae_forward.1} parent=1 // pred_check
      _
    $region75: #{cvae_forward.1} parent=1 // pred_check_branch
      %146 = sbr.rel (0) target = $region77
    $region76: #{cvae_forward.1} parent=1 // pred_region
      _
    $region77: #{cvae_forward.1} parent=1 // pred_fallthru
      _
    // Predicated region
    $region78: #{cvae_forward.1} parent=1 // pred_check
      _
    $region79: #{cvae_forward.1} parent=1 // pred_check_branch
      %148 = sbr.rel (0) target = $region81
    $region80: #{cvae_forward.1} parent=1 // pred_region
      _
    $region81: #{cvae_forward.1} parent=1 // pred_fallthru
      _
    // Predicated region
    $region82: #{cvae_forward.1} parent=1 // pred_check
      _
    $region83: #{cvae_forward.1} parent=1 // pred_check_branch
      %150 = sbr.rel (0) target = $region85
    $region84: #{cvae_forward.1} parent=1 // pred_region
      %151 = dma.done [#allocation3], 16
    $region85: #{cvae_forward.1} parent=1 // pred_fallthru
      _
    // Predicated region
    $region86: #{cvae_forward.1} parent=1 // pred_check
      _
    $region87: #{cvae_forward.1} parent=1 // pred_check_branch
      %153 = sbr.rel (0) target = $region89
    $region88: #{cvae_forward.1} parent=1 // pred_region
      %154 = dma.done [#allocation6], 16
    $region89: #{cvae_forward.1} parent=1 // pred_fallthru
      _
    // Predicated region
    $region90: #{cvae_forward.1} parent=1 // pred_check
      _
    $region91: #{cvae_forward.1} parent=1 // pred_check_branch
      %156 = sbr.rel (0) target = $region93
    $region92: #{cvae_forward.1} parent=1 // pred_region
      %157 = dma.done [#allocation6], 16
    $region93: #{cvae_forward.1} parent=1 // pred_fallthru
      _
    // Predicated region
    $region94: #{cvae_forward.1} parent=1 // pred_check
      _
    $region95: #{cvae_forward.1} parent=1 // pred_check_branch
      %159 = sbr.rel (0) target = $region97
    $region96: #{cvae_forward.1} parent=1 // pred_region
      %160 = dma.done [#allocation9], 16
    $region97: #{cvae_forward.1} parent=1 // pred_fallthru
      _
    // Predicated region
    $region98: #{cvae_forward.1} parent=1 // pred_check
      _
    $region99: #{cvae_forward.1} parent=1 // pred_check_branch
      %162 = sbr.rel (0) target = $region101
    $region100: #{cvae_forward.1} parent=1 // pred_region
      %163 = dma.done [#allocation9], 256
    $region101: #{cvae_forward.1} parent=1 // pred_fallthru
      _
    // Predicated region
    $region102: #{cvae_forward.1} parent=1 // pred_check
      _
    $region103: #{cvae_forward.1} parent=1 // pred_check_branch
      %165 = sbr.rel (0) target = $region105
    $region104: #{cvae_forward.1} parent=1 // pred_region
      %166 = dma.done [#allocation12], 16
    $region105: #{cvae_forward.1} parent=1 // pred_fallthru
      _
    // Predicated region
    $region106: #{cvae_forward.1} parent=1 // pred_check
      _
    $region107: #{cvae_forward.1} parent=1 // pred_check_branch
      %168 = sbr.rel (0) target = $region109
    $region108: #{cvae_forward.1} parent=1 // pred_region
      %169 = dma.done [#allocation12], 16
    $region109: #{cvae_forward.1} parent=1 // pred_fallthru
      _
    // Predicated region
    $region110: #{cvae_forward.1} parent=1 // pred_check
      _
    $region111: #{cvae_forward.1} parent=1 // pred_check_branch
      %171 = sbr.rel (0) target = $region113
    $region112: #{cvae_forward.1} parent=1 // pred_region
      %172 = dma.done [#allocation15], 16
    $region113: #{cvae_forward.1} parent=1 // pred_fallthru
      _
    // Predicated region
    $region114: #{cvae_forward.1} parent=1 // pred_check
      _
    $region115: #{cvae_forward.1} parent=1 // pred_check_branch
      %174 = sbr.rel (0) target = $region117
    $region116: #{cvae_forward.1} parent=1 // pred_region
      %175 = dma.done [#allocation15], 16
    $region117: #{cvae_forward.1} parent=1 // pred_fallthru
      _
    %v176 = vld [vmem:[%s0] sm:$0xf]
    %v177 = vld [vmem:[%s2] sm:$0xff]
    %v178 = vld [vmem:[%s2 + $0x8] sm:$0xff]
    %v179 = vld [vmem:[%s2 + $0x10] sm:$0xff]
    %v180 = vld [vmem:[%s2 + $0x18] sm:$0xff]
    %v181 = vld [vmem:[%s2 + $0x20] sm:$0xff]
    %v182 = vld [vmem:[%s2 + $0x28] sm:$0xff]
    %v183 = vld [vmem:[%s2 + $0x30] sm:$0xff]
    %v184 = vld [vmem:[%s2 + $0x38] sm:$0xff]
    %v185 = vld [vmem:[%s2 + $0x40] sm:$0xff]
    %v186 = vld [vmem:[%s2 + $0x48] sm:$0xff]
    %v187 = vld [vmem:[%s2 + $0x50] sm:$0xff]
    %v188 = vld [vmem:[%s2 + $0x58] sm:$0xff]
    %v189 = vld [vmem:[%s2 + $0x60] sm:$0xff]
    %v190 = vld [vmem:[%s2 + $0x68] sm:$0xff]
    %v191 = vld [vmem:[%s2 + $0x70] sm:$0xff]
    %v192 = vld [vmem:[%s2 + $0x78] sm:$0xff]
    %v193 = vld [vmem:[%s2 + $0x80] sm:$0xff]
    %v194 = vld [vmem:[%s2 + $0x88] sm:$0xff]
    %v195 = vld [vmem:[%s2 + $0x90] sm:$0xff]
    %v196 = vld [vmem:[%s2 + $0x98] sm:$0xff]
    %v197 = vld [vmem:[%s2 + $0xa0] sm:$0xff]
    %v198 = vld [vmem:[%s2 + $0xa8] sm:$0xff]
    %v199 = vld [vmem:[%s2 + $0xb0] sm:$0xf]
    %v202 = vunpack.c.l.s4 1983009808
    %v203 = vunpack.c.0.s8 %v202
    %v204 = vlaneseq
    %v205 = vshrl.u32 %v204, 7
    %v206 = vsub.s32 %v203, %v205
    %v207 = vrot.slane %v176, %v206
    %v208 = vcombine.high %v207, %v207
    %vm210 = vcmask 424960
    %v211 = vsel %vm210, %v208, 0
    %vm213 = vcmask 1043456
    %v215 = vsel %vm213, %v199, 0
    %217 = vmatprep.subr.mxu0 0.0
    %218 = vmatpush1.msra.mxu0 %v177
    %219 = vmatprep.subr.mxu0 0.0
    %220 = vmatpush1.msra.mxu0 %v178
    %221 = vmatprep.subr.mxu0 0.0
    %222 = vmatpush1.msra.mxu0 %v179
    %223 = vmatprep.subr.mxu0 0.0
    %224 = vmatpush1.msra.mxu0 %v180
    %225 = vmatprep.subr.mxu0 0.0
    %226 = vmatpush1.msra.mxu0 %v181
    %227 = vmatprep.subr.mxu0 0.0
    %228 = vmatpush1.msra.mxu0 %v182
    %229 = vmatprep.subr.mxu0 0.0
    %230 = vmatpush1.msra.mxu0 %v183
    %231 = vmatprep.subr.mxu0 0.0
    %232 = vmatpush1.msra.mxu0 %v184
    %233 = vmatprep.subr.mxu0 0.0
    %234 = vmatpush1.msra.mxu0 %v185
    %235 = vmatprep.subr.mxu0 0.0
    %236 = vmatpush1.msra.mxu0 %v186
    %237 = vmatprep.subr.mxu0 0.0
    %238 = vmatpush1.msra.mxu0 %v187
    %239 = vmatprep.subr.mxu0 0.0
    %240 = vmatpush1.msra.mxu0 %v188
    %241 = vmatprep.subr.mxu0 0.0
    %242 = vmatpush1.msra.mxu0 %v189
    %243 = vmatprep.subr.mxu0 0.0
    %244 = vmatpush1.msra.mxu0 %v190
    %245 = vmatprep.subr.mxu0 0.0
    %246 = vmatpush1.msra.mxu0 %v191
    %247 = vmatprep.subr.mxu0 0.0
    %248 = vmatpush1.msra.mxu0 %v192
    %249 = vmatprep.subr.mxu0 0.0
    %250 = vmatpush1.msra.mxu0 %v193
    %251 = vmatprep.subr.mxu0 0.0
    %252 = vmatpush1.msra.mxu0 %v194
    %253 = vmatprep.subr.mxu0 0.0
    %254 = vmatpush1.msra.mxu0 %v195
    %255 = vmatprep.subr.mxu0 0.0
    %256 = vmatpush1.msra.mxu0 %v196
    %257 = vmatprep.subr.mxu0 0.0
    %258 = vmatpush1.msra.mxu0 %v197
    %259 = vmatprep.subr.mxu0 0.0
    %260 = vmatpush1.msra.mxu0 %v198
    %261 = vmatprep.subr.mxu0 0.0
    %262 = vmatpush1.msra.mxu0 %v215
    %263 = vmatprep.subr.mxu0 0.0
    %264 = vmatpush1.msra.mxu0 0.0
    %265 = vmatprep.subr.mxu0 0.0
    %266 = vmatpush1.msra.mxu0 0.0
    %267 = vmatprep.subr.mxu0 0.0
    %268 = vmatpush1.msra.mxu0 0.0
    %269 = vmatprep.subr.mxu0 0.0
    %270 = vmatpush1.msra.mxu0 0.0
    %271 = vmatprep.subr.mxu0 0.0
    %272 = vmatpush1.msra.mxu0 0.0
    %273 = vmatprep.subr.mxu0 0.0
    %274 = vmatpush1.msra.mxu0 0.0
    %275 = vmatprep.subr.mxu0 0.0
    %276 = vmatpush1.msra.mxu0 0.0
    %277 = vmatprep.subr.mxu0 0.0
    %278 = vmatpush1.msra.mxu0 0.0
    %279 = vmatprep.subr.mxu0 0.0
    %280 = vmatpush1.msra.mxu0 0.0
    %281 = vmatprep.mubr.f32.mxu0 %v211
    %282 = vmatmul.mubr.f32.gmra.mrb[0].mxu0 %v207
    %v283 = vpop.f32.mrb[0].mxu0
    %v284 = vadd.f32 0.0, %v283
    %v285 = vpop.f32.mrb[0].mxu0
    %286 = vdwg.mxu0
    %vm287 = vcmask 910336
    %v288 = vsel %vm287, %v284, 0.0
    %v289 = vrot.slane %v288, 4
    %v290 = vadd.f32 %v288, %v289
    %v291 = vrot.slane %v290, 2
    %v292 = vadd.f32 %v290, %v291
    %v293 = vrot.slane %v292, 1
    %v294 = vadd.f32 %v292, %v293
    %v295 = vld [vmem:[%s3] sm:$0xff]
    %v296 = vld [vmem:[%s3 + $0x8] sm:$0xff]
    %v297 = vld [vmem:[%s3 + $0x10] sm:$0xff]
    %v298 = vld [vmem:[%s3 + $0x18] sm:$0xff]
    %v299 = vld [vmem:[%s3 + $0x20] sm:$0xff]
    %v300 = vld [vmem:[%s3 + $0x28] sm:$0xff]
    %v301 = vld [vmem:[%s3 + $0x30] sm:$0xff]
    %v302 = vld [vmem:[%s3 + $0x38] sm:$0xff]
    %v303 = vld [vmem:[%s3 + $0x40] sm:$0xff]
    %v304 = vld [vmem:[%s3 + $0x48] sm:$0xff]
    %v305 = vld [vmem:[%s3 + $0x50] sm:$0xff]
    %v306 = vld [vmem:[%s3 + $0x58] sm:$0xff]
    %v307 = vld [vmem:[%s3 + $0x60] sm:$0xff]
    %v308 = vld [vmem:[%s3 + $0x68] sm:$0xff]
    %vm309 = vcmask 916480
    %v311 = vsel %vm309, %v294, 0
    %313 = vmatprep.subr.mxu0 0.0
    %314 = vmatpush1.msra.mxu0 %v295
    %315 = vmatprep.subr.mxu0 0.0
    %316 = vmatpush1.msra.mxu0 %v296
    %317 = vmatprep.subr.mxu0 0.0
    %318 = vmatpush1.msra.mxu0 %v297
    %319 = vmatprep.subr.mxu0 0.0
    %320 = vmatpush1.msra.mxu0 %v298
    %321 = vmatprep.subr.mxu0 0.0
    %322 = vmatpush1.msra.mxu0 %v299
    %323 = vmatprep.subr.mxu0 0.0
    %324 = vmatpush1.msra.mxu0 %v300
    %325 = vmatprep.subr.mxu0 0.0
    %326 = vmatpush1.msra.mxu0 %v301
    %327 = vmatprep.subr.mxu0 0.0
    %328 = vmatpush1.msra.mxu0 %v302
    %329 = vmatprep.subr.mxu0 0.0
    %330 = vmatpush1.msra.mxu0 %v303
    %331 = vmatprep.subr.mxu0 0.0
    %332 = vmatpush1.msra.mxu0 %v304
    %333 = vmatprep.subr.mxu0 0.0
    %334 = vmatpush1.msra.mxu0 %v305
    %335 = vmatprep.subr.mxu0 0.0
    %336 = vmatpush1.msra.mxu0 %v306
    %337 = vmatprep.subr.mxu0 0.0
    %338 = vmatpush1.msra.mxu0 %v307
    %339 = vmatprep.subr.mxu0 0.0
    %340 = vmatpush1.msra.mxu0 %v308
    %341 = vmatprep.subr.mxu0 0.0
    %342 = vmatpush1.msra.mxu0 0.0
    %343 = vmatprep.subr.mxu0 0.0
    %344 = vmatpush1.msra.mxu0 0.0
    %345 = vmatprep.subr.mxu0 0.0
    %346 = vmatpush1.msra.mxu0 0.0
    %347 = vmatprep.subr.mxu0 0.0
    %348 = vmatpush1.msra.mxu0 0.0
    %349 = vmatprep.subr.mxu0 0.0
    %350 = vmatpush1.msra.mxu0 0.0
    %351 = vmatprep.subr.mxu0 0.0
    %352 = vmatpush1.msra.mxu0 0.0
    %353 = vmatprep.subr.mxu0 0.0
    %354 = vmatpush1.msra.mxu0 0.0
    %355 = vmatprep.subr.mxu0 0.0
    %356 = vmatpush1.msra.mxu0 0.0
    %357 = vmatprep.subr.mxu0 0.0
    %358 = vmatpush1.msra.mxu0 0.0
    %359 = vmatprep.subr.mxu0 0.0
    %360 = vmatpush1.msra.mxu0 0.0
    %361 = vmatprep.subr.mxu0 0.0
    %362 = vmatpush1.msra.mxu0 0.0
    %363 = vmatprep.subr.mxu0 0.0
    %364 = vmatpush1.msra.mxu0 0.0
    %365 = vmatprep.subr.mxu0 0.0
    %366 = vmatpush1.msra.mxu0 0.0
    %367 = vmatprep.subr.mxu0 0.0
    %368 = vmatpush1.msra.mxu0 0.0
    %369 = vmatprep.subr.mxu0 0.0
    %370 = vmatpush1.msra.mxu0 0.0
    %371 = vmatprep.subr.mxu0 0.0
    %372 = vmatpush1.msra.mxu0 0.0
    %373 = vmatprep.subr.mxu0 0.0
    %374 = vmatpush1.msra.mxu0 0.0
    %375 = vmatprep.subr.mxu0 0.0
    %376 = vmatpush1.msra.mxu0 0.0
    %377 = vmatprep.mubr.f32.mxu0 0.0
    %378 = vmatmul.mubr.f32.gmra.mrb[0].mxu0 %v311
    %v379 = vpop.f32.mrb[0].mxu0
    %v380 = vadd.f32 0.0, %v379
    %v381 = vpop.f32.mrb[0].mxu0
    %382 = vdwg.mxu0
    %v383 = vmul.f32 %v380, 0.071428575
    %v384 = vlaneseq
    %v385 = vshrl.u32 %v384, 7
    %v386 = vsub.s32 0, %v385
    %v387 = vrot.slane %v383, %v386
    %v388 = vsub.f32 %v284, %v387
    %v389 = vmul.f32 %v388, %v388
    %v390 = vsel %vm287, %v389, 0.0
    %v391 = vrot.slane %v390, 4
    %v392 = vadd.f32 %v390, %v391
    %v393 = vrot.slane %v392, 2
    %v394 = vadd.f32 %v392, %v393
    %v395 = vrot.slane %v394, 1
    %v396 = vadd.f32 %v394, %v395
    %v398 = vsel %vm309, %v396, 0
    %400 = vmatprep.subr.mxu0 0.0
    %401 = vmatpush1.msra.mxu0 %v295
    %402 = vmatprep.subr.mxu0 0.0
    %403 = vmatpush1.msra.mxu0 %v296
    %404 = vmatprep.subr.mxu0 0.0
    %405 = vmatpush1.msra.mxu0 %v297
    %406 = vmatprep.subr.mxu0 0.0
    %407 = vmatpush1.msra.mxu0 %v298
    %408 = vmatprep.subr.mxu0 0.0
    %409 = vmatpush1.msra.mxu0 %v299
    %410 = vmatprep.subr.mxu0 0.0
    %411 = vmatpush1.msra.mxu0 %v300
    %412 = vmatprep.subr.mxu0 0.0
    %413 = vmatpush1.msra.mxu0 %v301
    %414 = vmatprep.subr.mxu0 0.0
    %415 = vmatpush1.msra.mxu0 %v302
    %416 = vmatprep.subr.mxu0 0.0
    %417 = vmatpush1.msra.mxu0 %v303
    %418 = vmatprep.subr.mxu0 0.0
    %419 = vmatpush1.msra.mxu0 %v304
    %420 = vmatprep.subr.mxu0 0.0
    %421 = vmatpush1.msra.mxu0 %v305
    %422 = vmatprep.subr.mxu0 0.0
    %423 = vmatpush1.msra.mxu0 %v306
    %424 = vmatprep.subr.mxu0 0.0
    %425 = vmatpush1.msra.mxu0 %v307
    %426 = vmatprep.subr.mxu0 0.0
    %427 = vmatpush1.msra.mxu0 %v308
    %428 = vmatprep.subr.mxu0 0.0
    %429 = vmatpush1.msra.mxu0 0.0
    %430 = vmatprep.subr.mxu0 0.0
    %431 = vmatpush1.msra.mxu0 0.0
    %432 = vmatprep.subr.mxu0 0.0
    %433 = vmatpush1.msra.mxu0 0.0
    %434 = vmatprep.subr.mxu0 0.0
    %435 = vmatpush1.msra.mxu0 0.0
    %436 = vmatprep.subr.mxu0 0.0
    %437 = vmatpush1.msra.mxu0 0.0
    %438 = vmatprep.subr.mxu0 0.0
    %439 = vmatpush1.msra.mxu0 0.0
    %440 = vmatprep.subr.mxu0 0.0
    %441 = vmatpush1.msra.mxu0 0.0
    %442 = vmatprep.subr.mxu0 0.0
    %443 = vmatpush1.msra.mxu0 0.0
    %444 = vmatprep.subr.mxu0 0.0
    %445 = vmatpush1.msra.mxu0 0.0
    %446 = vmatprep.subr.mxu0 0.0
    %447 = vmatpush1.msra.mxu0 0.0
    %448 = vmatprep.subr.mxu0 0.0
    %449 = vmatpush1.msra.mxu0 0.0
    %450 = vmatprep.subr.mxu0 0.0
    %451 = vmatpush1.msra.mxu0 0.0
    %452 = vmatprep.subr.mxu0 0.0
    %453 = vmatpush1.msra.mxu0 0.0
    %454 = vmatprep.subr.mxu0 0.0
    %455 = vmatpush1.msra.mxu0 0.0
    %456 = vmatprep.subr.mxu0 0.0
    %457 = vmatpush1.msra.mxu0 0.0
    %458 = vmatprep.subr.mxu0 0.0
    %459 = vmatpush1.msra.mxu0 0.0
    %460 = vmatprep.subr.mxu0 0.0
    %461 = vmatpush1.msra.mxu0 0.0
    %462 = vmatprep.subr.mxu0 0.0
    %463 = vmatpush1.msra.mxu0 0.0
    %464 = vmatprep.mubr.f32.mxu0 0.0
    %465 = vmatmul.mubr.f32.gmra.mrb[0].mxu0 %v398
    %v466 = vpop.f32.mrb[0].mxu0
    %v467 = vadd.f32 0.0, %v466
    %v468 = vpop.f32.mrb[0].mxu0
    %469 = vdwg.mxu0
    %v470 = vmul.f32 %v467, 0.071428575
    %v471 = vld [vmem:[#allocation2] sm:$0x1]
    %v472 = vadd.f32 %v470, 1e-05
    %v473 = vrsqrt.pop %v472
    %v474 = vmul.f32 %v471, %v473
    %v476 = vlaneseq
    %v477 = vshrl.u32 %v476, 7
    %v478 = vsub.s32 0, %v477
    %v479 = vrot.slane %v474, %v478
    %v481 = vmul.f32 %v388, %v479
    %v482 = vld [vmem:[#allocation5] sm:$0x1]
    %v484 = vlaneseq
    %v485 = vshrl.u32 %v484, 7
    %v486 = vsub.s32 0, %v485
    %v487 = vrot.slane %v482, %v486
    %v489 = vadd.f32 %v481, %v487
    %v490 = vmax.f32 %v489, 0.0
    %v491 = vld [vmem:[%s6] sm:$0xff]
    %v492 = vld [vmem:[%s6 + $0x8] sm:$0xff]
    %v493 = vld [vmem:[%s6 + $0x10] sm:$0xff]
    %v494 = vld [vmem:[%s6 + $0x18] sm:$0xff]
    %v495 = vld [vmem:[%s6 + $0x20] sm:$0xff]
    %v496 = vld [vmem:[%s6 + $0x28] sm:$0xff]
    %v497 = vld [vmem:[%s6 + $0x30] sm:$0xff]
    %v498 = vld [vmem:[%s6 + $0x38] sm:$0xff]
    %v499 = vld [vmem:[%s6 + $0x40] sm:$0xff]
    %v500 = vld [vmem:[%s6 + $0x48] sm:$0xff]
    %v501 = vld [vmem:[%s6 + $0x50] sm:$0xff]
    %v502 = vld [vmem:[%s6 + $0x58] sm:$0xff]
    %v503 = vld [vmem:[%s6 + $0x60] sm:$0xff]
    %v504 = vld [vmem:[%s6 + $0x68] sm:$0xff]
    %v506 = vsel %vm309, %v490, 0
    %508 = vmatprep.subr.mxu0 0.0
    %509 = vmatpush1.msra.mxu0 %v491
    %510 = vmatprep.subr.mxu0 0.0
    %511 = vmatpush1.msra.mxu0 %v492
    %512 = vmatprep.subr.mxu0 0.0
    %513 = vmatpush1.msra.mxu0 %v493
    %514 = vmatprep.subr.mxu0 0.0
    %515 = vmatpush1.msra.mxu0 %v494
    %516 = vmatprep.subr.mxu0 0.0
    %517 = vmatpush1.msra.mxu0 %v495
    %518 = vmatprep.subr.mxu0 0.0
    %519 = vmatpush1.msra.mxu0 %v496
    %520 = vmatprep.subr.mxu0 0.0
    %521 = vmatpush1.msra.mxu0 %v497
    %522 = vmatprep.subr.mxu0 0.0
    %523 = vmatpush1.msra.mxu0 %v498
    %524 = vmatprep.subr.mxu0 0.0
    %525 = vmatpush1.msra.mxu0 %v499
    %526 = vmatprep.subr.mxu0 0.0
    %527 = vmatpush1.msra.mxu0 %v500
    %528 = vmatprep.subr.mxu0 0.0
    %529 = vmatpush1.msra.mxu0 %v501
    %530 = vmatprep.subr.mxu0 0.0
    %531 = vmatpush1.msra.mxu0 %v502
    %532 = vmatprep.subr.mxu0 0.0
    %533 = vmatpush1.msra.mxu0 %v503
    %534 = vmatprep.subr.mxu0 0.0
    %535 = vmatpush1.msra.mxu0 %v504
    %536 = vmatprep.subr.mxu0 0.0
    %537 = vmatpush1.msra.mxu0 0.0
    %538 = vmatprep.subr.mxu0 0.0
    %539 = vmatpush1.msra.mxu0 0.0
    %540 = vmatprep.subr.mxu0 0.0
    %541 = vmatpush1.msra.mxu0 0.0
    %542 = vmatprep.subr.mxu0 0.0
    %543 = vmatpush1.msra.mxu0 0.0
    %544 = vmatprep.subr.mxu0 0.0
    %545 = vmatpush1.msra.mxu0 0.0
    %546 = vmatprep.subr.mxu0 0.0
    %547 = vmatpush1.msra.mxu0 0.0
    %548 = vmatprep.subr.mxu0 0.0
    %549 = vmatpush1.msra.mxu0 0.0
    %550 = vmatprep.subr.mxu0 0.0
    %551 = vmatpush1.msra.mxu0 0.0
    %552 = vmatprep.subr.mxu0 0.0
    %553 = vmatpush1.msra.mxu0 0.0
    %554 = vmatprep.subr.mxu0 0.0
    %555 = vmatpush1.msra.mxu0 0.0
    %556 = vmatprep.subr.mxu0 0.0
    %557 = vmatpush1.msra.mxu0 0.0
    %558 = vmatprep.subr.mxu0 0.0
    %559 = vmatpush1.msra.mxu0 0.0
    %560 = vmatprep.subr.mxu0 0.0
    %561 = vmatpush1.msra.mxu0 0.0
    %562 = vmatprep.subr.mxu0 0.0
    %563 = vmatpush1.msra.mxu0 0.0
    %564 = vmatprep.subr.mxu0 0.0
    %565 = vmatpush1.msra.mxu0 0.0
    %566 = vmatprep.subr.mxu0 0.0
    %567 = vmatpush1.msra.mxu0 0.0
    %568 = vmatprep.subr.mxu0 0.0
    %569 = vmatpush1.msra.mxu0 0.0
    %570 = vmatprep.subr.mxu0 0.0
    %571 = vmatpush1.msra.mxu0 0.0
    %572 = vmatprep.mubr.f32.mxu0 0.0
    %573 = vmatmul.mubr.f32.gmra.mrb[0].mxu0 %v506
    %v574 = vpop.f32.mrb[0].mxu0
    %v575 = vadd.f32 0.0, %v574
    %v576 = vpop.f32.mrb[0].mxu0
    %577 = vdwg.mxu0
    %vm578 = vcmask 320512
    %v579 = vsel %vm578, %v575, 0.0
    %v580 = vrot.slane %v579, 4
    %v581 = vadd.f32 %v579, %v580
    %v582 = vrot.slane %v581, 2
    %v583 = vadd.f32 %v581, %v582
    %v584 = vrot.slane %v583, 1
    %v585 = vadd.f32 %v583, %v584
    %v586 = vld [vmem:[%s7] sm:$0xff]
    %v587 = vld [vmem:[%s7 + $0x8] sm:$0xff]
    %v588 = vld [vmem:[%s7 + $0x10] sm:$0xff]
    %v589 = vld [vmem:[%s7 + $0x18] sm:$0xff]
    %v590 = vld [vmem:[%s7 + $0x20] sm:$0xff]
    %vm591 = vcmask 326656
    %v593 = vsel %vm591, %v585, 0
    %595 = vmatprep.subr.mxu0 0.0
    %596 = vmatpush1.msra.mxu0 %v586
    %597 = vmatprep.subr.mxu0 0.0
    %598 = vmatpush1.msra.mxu0 %v587
    %599 = vmatprep.subr.mxu0 0.0
    %600 = vmatpush1.msra.mxu0 %v588
    %601 = vmatprep.subr.mxu0 0.0
    %602 = vmatpush1.msra.mxu0 %v589
    %603 = vmatprep.subr.mxu0 0.0
    %604 = vmatpush1.msra.mxu0 %v590
    %605 = vmatprep.subr.mxu0 0.0
    %606 = vmatpush1.msra.mxu0 0.0
    %607 = vmatprep.subr.mxu0 0.0
    %608 = vmatpush1.msra.mxu0 0.0
    %609 = vmatprep.subr.mxu0 0.0
    %610 = vmatpush1.msra.mxu0 0.0
    %611 = vmatprep.subr.mxu0 0.0
    %612 = vmatpush1.msra.mxu0 0.0
    %613 = vmatprep.subr.mxu0 0.0
    %614 = vmatpush1.msra.mxu0 0.0
    %615 = vmatprep.subr.mxu0 0.0
    %616 = vmatpush1.msra.mxu0 0.0
    %617 = vmatprep.subr.mxu0 0.0
    %618 = vmatpush1.msra.mxu0 0.0
    %619 = vmatprep.subr.mxu0 0.0
    %620 = vmatpush1.msra.mxu0 0.0
    %621 = vmatprep.subr.mxu0 0.0
    %622 = vmatpush1.msra.mxu0 0.0
    %623 = vmatprep.subr.mxu0 0.0
    %624 = vmatpush1.msra.mxu0 0.0
    %625 = vmatprep.subr.mxu0 0.0
    %626 = vmatpush1.msra.mxu0 0.0
    %627 = vmatprep.subr.mxu0 0.0
    %628 = vmatpush1.msra.mxu0 0.0
    %629 = vmatprep.subr.mxu0 0.0
    %630 = vmatpush1.msra.mxu0 0.0
    %631 = vmatprep.subr.mxu0 0.0
    %632 = vmatpush1.msra.mxu0 0.0
    %633 = vmatprep.subr.mxu0 0.0
    %634 = vmatpush1.msra.mxu0 0.0
    %635 = vmatprep.subr.mxu0 0.0
    %636 = vmatpush1.msra.mxu0 0.0
    %637 = vmatprep.subr.mxu0 0.0
    %638 = vmatpush1.msra.mxu0 0.0
    %639 = vmatprep.subr.mxu0 0.0
    %640 = vmatpush1.msra.mxu0 0.0
    %641 = vmatprep.subr.mxu0 0.0
    %642 = vmatpush1.msra.mxu0 0.0
    %643 = vmatprep.subr.mxu0 0.0
    %644 = vmatpush1.msra.mxu0 0.0
    %645 = vmatprep.subr.mxu0 0.0
    %646 = vmatpush1.msra.mxu0 0.0
    %647 = vmatprep.subr.mxu0 0.0
    %648 = vmatpush1.msra.mxu0 0.0
    %649 = vmatprep.subr.mxu0 0.0
    %650 = vmatpush1.msra.mxu0 0.0
    %651 = vmatprep.subr.mxu0 0.0
    %652 = vmatpush1.msra.mxu0 0.0
    %653 = vmatprep.subr.mxu0 0.0
    %654 = vmatpush1.msra.mxu0 0.0
    %655 = vmatprep.subr.mxu0 0.0
    %656 = vmatpush1.msra.mxu0 0.0
    %657 = vmatprep.subr.mxu0 0.0
    %658 = vmatpush1.msra.mxu0 0.0
    %659 = vmatprep.mubr.f32.mxu0 0.0
    %660 = vmatmul.mubr.f32.gmra.mrb[0].mxu0 %v593
    %v661 = vpop.f32.mrb[0].mxu0
    %v662 = vadd.f32 0.0, %v661
    %v663 = vpop.f32.mrb[0].mxu0
    %664 = vdwg.mxu0
    %v665 = vmul.f32 %v662, 0.1
    %v666 = vlaneseq
    %v667 = vshrl.u32 %v666, 7
    %v668 = vsub.s32 0, %v667
    %v669 = vrot.slane %v665, %v668
    %v670 = vsub.f32 %v575, %v669
    %v671 = vmul.f32 %v670, %v670
    %v672 = vsel %vm578, %v671, 0.0
    %v673 = vrot.slane %v672, 4
    %v674 = vadd.f32 %v672, %v673
    %v675 = vrot.slane %v674, 2
    %v676 = vadd.f32 %v674, %v675
    %v677 = vrot.slane %v676, 1
    %v678 = vadd.f32 %v676, %v677
    %v680 = vsel %vm591, %v678, 0
    %682 = vmatprep.subr.mxu0 0.0
    %683 = vmatpush1.msra.mxu0 %v586
    %684 = vmatprep.subr.mxu0 0.0
    %685 = vmatpush1.msra.mxu0 %v587
    %686 = vmatprep.subr.mxu0 0.0
    %687 = vmatpush1.msra.mxu0 %v588
    %688 = vmatprep.subr.mxu0 0.0
    %689 = vmatpush1.msra.mxu0 %v589
    %690 = vmatprep.subr.mxu0 0.0
    %691 = vmatpush1.msra.mxu0 %v590
    %692 = vmatprep.subr.mxu0 0.0
    %693 = vmatpush1.msra.mxu0 0.0
    %694 = vmatprep.subr.mxu0 0.0
    %695 = vmatpush1.msra.mxu0 0.0
    %696 = vmatprep.subr.mxu0 0.0
    %697 = vmatpush1.msra.mxu0 0.0
    %698 = vmatprep.subr.mxu0 0.0
    %699 = vmatpush1.msra.mxu0 0.0
    %700 = vmatprep.subr.mxu0 0.0
    %701 = vmatpush1.msra.mxu0 0.0
    %702 = vmatprep.subr.mxu0 0.0
    %703 = vmatpush1.msra.mxu0 0.0
    %704 = vmatprep.subr.mxu0 0.0
    %705 = vmatpush1.msra.mxu0 0.0
    %706 = vmatprep.subr.mxu0 0.0
    %707 = vmatpush1.msra.mxu0 0.0
    %708 = vmatprep.subr.mxu0 0.0
    %709 = vmatpush1.msra.mxu0 0.0
    %710 = vmatprep.subr.mxu0 0.0
    %711 = vmatpush1.msra.mxu0 0.0
    %712 = vmatprep.subr.mxu0 0.0
    %713 = vmatpush1.msra.mxu0 0.0
    %714 = vmatprep.subr.mxu0 0.0
    %715 = vmatpush1.msra.mxu0 0.0
    %716 = vmatprep.subr.mxu0 0.0
    %717 = vmatpush1.msra.mxu0 0.0
    %718 = vmatprep.subr.mxu0 0.0
    %719 = vmatpush1.msra.mxu0 0.0
    %720 = vmatprep.subr.mxu0 0.0
    %721 = vmatpush1.msra.mxu0 0.0
    %722 = vmatprep.subr.mxu0 0.0
    %723 = vmatpush1.msra.mxu0 0.0
    %724 = vmatprep.subr.mxu0 0.0
    %725 = vmatpush1.msra.mxu0 0.0
    %726 = vmatprep.subr.mxu0 0.0
    %727 = vmatpush1.msra.mxu0 0.0
    %728 = vmatprep.subr.mxu0 0.0
    %729 = vmatpush1.msra.mxu0 0.0
    %730 = vmatprep.subr.mxu0 0.0
    %731 = vmatpush1.msra.mxu0 0.0
    %732 = vmatprep.subr.mxu0 0.0
    %733 = vmatpush1.msra.mxu0 0.0
    %734 = vmatprep.subr.mxu0 0.0
    %735 = vmatpush1.msra.mxu0 0.0
    %736 = vmatprep.subr.mxu0 0.0
    %737 = vmatpush1.msra.mxu0 0.0
    %738 = vmatprep.subr.mxu0 0.0
    %739 = vmatpush1.msra.mxu0 0.0
    %740 = vmatprep.subr.mxu0 0.0
    %741 = vmatpush1.msra.mxu0 0.0
    %742 = vmatprep.subr.mxu0 0.0
    %743 = vmatpush1.msra.mxu0 0.0
    %744 = vmatprep.subr.mxu0 0.0
    %745 = vmatpush1.msra.mxu0 0.0
    %746 = vmatprep.mubr.f32.mxu0 0.0
    %747 = vmatmul.mubr.f32.gmra.mrb[0].mxu0 %v680
    %v748 = vpop.f32.mrb[0].mxu0
    %v749 = vadd.f32 0.0, %v748
    %v750 = vpop.f32.mrb[0].mxu0
    %751 = vdwg.mxu0
    %v752 = vmul.f32 %v749, 0.1
    %v753 = vld [vmem:[#allocation7] sm:$0x1]
    %v754 = vadd.f32 %v752, 1e-05
    %v755 = vrsqrt.pop %v754
    %v756 = vmul.f32 %v753, %v755
    %v758 = vlaneseq
    %v759 = vshrl.u32 %v758, 7
    %v760 = vsub.s32 0, %v759
    %v761 = vrot.slane %v756, %v760
    %v763 = vmul.f32 %v670, %v761
    %v764 = vld [vmem:[#allocation8] sm:$0x1]
    %v766 = vlaneseq
    %v767 = vshrl.u32 %v766, 7
    %v768 = vsub.s32 0, %v767
    %v769 = vrot.slane %v764, %v768
    %v771 = vadd.f32 %v763, %v769
    %v772 = vmax.f32 %v771, 0.0
    %v773 = vld [vmem:[%s10] sm:$0xff]
    %v774 = vld [vmem:[%s10 + $0x8] sm:$0xff]
    %v775 = vld [vmem:[%s10 + $0x10] sm:$0xff]
    %v776 = vld [vmem:[%s10 + $0x18] sm:$0xff]
    %v777 = vld [vmem:[%s10 + $0x20] sm:$0xff]
    %v779 = vsel %vm591, %v772, 0
    %781 = vmatprep.subr.mxu0 0.0
    %782 = vmatpush1.msra.mxu0 %v773
    %783 = vmatprep.subr.mxu0 0.0
    %784 = vmatpush1.msra.mxu0 %v774
    %785 = vmatprep.subr.mxu0 0.0
    %786 = vmatpush1.msra.mxu0 %v775
    %787 = vmatprep.subr.mxu0 0.0
    %788 = vmatpush1.msra.mxu0 %v776
    %789 = vmatprep.subr.mxu0 0.0
    %790 = vmatpush1.msra.mxu0 %v777
    %791 = vmatprep.subr.mxu0 0.0
    %792 = vmatpush1.msra.mxu0 0.0
    %793 = vmatprep.subr.mxu0 0.0
    %794 = vmatpush1.msra.mxu0 0.0
    %795 = vmatprep.subr.mxu0 0.0
    %796 = vmatpush1.msra.mxu0 0.0
    %797 = vmatprep.subr.mxu0 0.0
    %798 = vmatpush1.msra.mxu0 0.0
    %799 = vmatprep.subr.mxu0 0.0
    %800 = vmatpush1.msra.mxu0 0.0
    %801 = vmatprep.subr.mxu0 0.0
    %802 = vmatpush1.msra.mxu0 0.0
    %803 = vmatprep.subr.mxu0 0.0
    %804 = vmatpush1.msra.mxu0 0.0
    %805 = vmatprep.subr.mxu0 0.0
    %806 = vmatpush1.msra.mxu0 0.0
    %807 = vmatprep.subr.mxu0 0.0
    %808 = vmatpush1.msra.mxu0 0.0
    %809 = vmatprep.subr.mxu0 0.0
    %810 = vmatpush1.msra.mxu0 0.0
    %811 = vmatprep.subr.mxu0 0.0
    %812 = vmatpush1.msra.mxu0 0.0
    %813 = vmatprep.subr.mxu0 0.0
    %814 = vmatpush1.msra.mxu0 0.0
    %815 = vmatprep.subr.mxu0 0.0
    %816 = vmatpush1.msra.mxu0 0.0
    %817 = vmatprep.subr.mxu0 0.0
    %818 = vmatpush1.msra.mxu0 0.0
    %819 = vmatprep.subr.mxu0 0.0
    %820 = vmatpush1.msra.mxu0 0.0
    %821 = vmatprep.subr.mxu0 0.0
    %822 = vmatpush1.msra.mxu0 0.0
    %823 = vmatprep.subr.mxu0 0.0
    %824 = vmatpush1.msra.mxu0 0.0
    %825 = vmatprep.subr.mxu0 0.0
    %826 = vmatpush1.msra.mxu0 0.0
    %827 = vmatprep.subr.mxu0 0.0
    %828 = vmatpush1.msra.mxu0 0.0
    %829 = vmatprep.subr.mxu0 0.0
    %830 = vmatpush1.msra.mxu0 0.0
    %831 = vmatprep.subr.mxu0 0.0
    %832 = vmatpush1.msra.mxu0 0.0
    %833 = vmatprep.subr.mxu0 0.0
    %834 = vmatpush1.msra.mxu0 0.0
    %835 = vmatprep.subr.mxu0 0.0
    %836 = vmatpush1.msra.mxu0 0.0
    %837 = vmatprep.subr.mxu0 0.0
    %838 = vmatpush1.msra.mxu0 0.0
    %839 = vmatprep.subr.mxu0 0.0
    %840 = vmatpush1.msra.mxu0 0.0
    %841 = vmatprep.subr.mxu0 0.0
    %842 = vmatpush1.msra.mxu0 0.0
    %843 = vmatprep.subr.mxu0 0.0
    %844 = vmatpush1.msra.mxu0 0.0
    %845 = vmatprep.mubr.f32.mxu0 0.0
    %846 = vmatmul.mubr.f32.gmra.mrb[0].mxu0 %v779
    %v847 = vpop.f32.mrb[0].mxu0
    %v848 = vadd.f32 0.0, %v847
    %v849 = vpop.f32.mrb[0].mxu0
    %850 = vdwg.mxu0
    %vm851 = vcmask 91136
    %v852 = vsel %vm851, %v848, 0.0
    %v853 = vrot.slane %v852, 4
    %v854 = vadd.f32 %v852, %v853
    %v855 = vrot.slane %v854, 2
    %v856 = vadd.f32 %v854, %v855
    %v857 = vrot.slane %v856, 1
    %v858 = vadd.f32 %v856, %v857
    %v859 = vld [vmem:[#allocation10] sm:$0xff]
    %v860 = vld [vmem:[#allocation10 + $0x8] sm:$0xf]
    %vm861 = vcmask 97280
    %v863 = vsel %vm861, %v858, 0
    %v866 = vsel %vm213, %v860, 0
    %868 = vmatprep.subr.mxu0 0.0
    %869 = vmatpush1.msra.mxu0 %v859
    %870 = vmatprep.subr.mxu0 0.0
    %871 = vmatpush1.msra.mxu0 %v866
    %872 = vmatprep.subr.mxu0 0.0
    %873 = vmatpush1.msra.mxu0 0.0
    %874 = vmatprep.subr.mxu0 0.0
    %875 = vmatpush1.msra.mxu0 0.0
    %876 = vmatprep.subr.mxu0 0.0
    %877 = vmatpush1.msra.mxu0 0.0
    %878 = vmatprep.subr.mxu0 0.0
    %879 = vmatpush1.msra.mxu0 0.0
    %880 = vmatprep.subr.mxu0 0.0
    %881 = vmatpush1.msra.mxu0 0.0
    %882 = vmatprep.subr.mxu0 0.0
    %883 = vmatpush1.msra.mxu0 0.0
    %884 = vmatprep.subr.mxu0 0.0
    %885 = vmatpush1.msra.mxu0 0.0
    %886 = vmatprep.subr.mxu0 0.0
    %887 = vmatpush1.msra.mxu0 0.0
    %888 = vmatprep.subr.mxu0 0.0
    %889 = vmatpush1.msra.mxu0 0.0
    %890 = vmatprep.subr.mxu0 0.0
    %891 = vmatpush1.msra.mxu0 0.0
    %892 = vmatprep.subr.mxu0 0.0
    %893 = vmatpush1.msra.mxu0 0.0
    %894 = vmatprep.subr.mxu0 0.0
    %895 = vmatpush1.msra.mxu0 0.0
    %896 = vmatprep.subr.mxu0 0.0
    %897 = vmatpush1.msra.mxu0 0.0
    %898 = vmatprep.subr.mxu0 0.0
    %899 = vmatpush1.msra.mxu0 0.0
    %900 = vmatprep.subr.mxu0 0.0
    %901 = vmatpush1.msra.mxu0 0.0
    %902 = vmatprep.subr.mxu0 0.0
    %903 = vmatpush1.msra.mxu0 0.0
    %904 = vmatprep.subr.mxu0 0.0
    %905 = vmatpush1.msra.mxu0 0.0
    %906 = vmatprep.subr.mxu0 0.0
    %907 = vmatpush1.msra.mxu0 0.0
    %908 = vmatprep.subr.mxu0 0.0
    %909 = vmatpush1.msra.mxu0 0.0
    %910 = vmatprep.subr.mxu0 0.0
    %911 = vmatpush1.msra.mxu0 0.0
    %912 = vmatprep.subr.mxu0 0.0
    %913 = vmatpush1.msra.mxu0 0.0
    %914 = vmatprep.subr.mxu0 0.0
    %915 = vmatpush1.msra.mxu0 0.0
    %916 = vmatprep.subr.mxu0 0.0
    %917 = vmatpush1.msra.mxu0 0.0
    %918 = vmatprep.subr.mxu0 0.0
    %919 = vmatpush1.msra.mxu0 0.0
    %920 = vmatprep.subr.mxu0 0.0
    %921 = vmatpush1.msra.mxu0 0.0
    %922 = vmatprep.subr.mxu0 0.0
    %923 = vmatpush1.msra.mxu0 0.0
    %924 = vmatprep.subr.mxu0 0.0
    %925 = vmatpush1.msra.mxu0 0.0
    %926 = vmatprep.subr.mxu0 0.0
    %927 = vmatpush1.msra.mxu0 0.0
    %928 = vmatprep.subr.mxu0 0.0
    %929 = vmatpush1.msra.mxu0 0.0
    %930 = vmatprep.subr.mxu0 0.0
    %931 = vmatpush1.msra.mxu0 0.0
    %932 = vmatprep.mubr.f32.mxu0 0.0
    %933 = vmatmul.mubr.f32.gmra.mrb[0].mxu0 %v863
    %v934 = vpop.f32.mrb[0].mxu0
    %v935 = vadd.f32 0.0, %v934
    %v936 = vpop.f32.mrb[0].mxu0
    %937 = vdwg.mxu0
    %v938 = vmul.f32 %v935, 0.16666667
    %v939 = vlaneseq
    %v940 = vshrl.u32 %v939, 7
    %v941 = vsub.s32 0, %v940
    %v942 = vrot.slane %v938, %v941
    %v943 = vsub.f32 %v848, %v942
    %v944 = vmul.f32 %v943, %v943
    %v945 = vsel %vm851, %v944, 0.0
    %v946 = vrot.slane %v945, 4
    %v947 = vadd.f32 %v945, %v946
    %v948 = vrot.slane %v947, 2
    %v949 = vadd.f32 %v947, %v948
    %v950 = vrot.slane %v949, 1
    %v951 = vadd.f32 %v949, %v950
    %v953 = vsel %vm861, %v951, 0
    %955 = vmatprep.subr.mxu0 0.0
    %956 = vmatpush1.msra.mxu0 %v859
    %957 = vmatprep.subr.mxu0 0.0
    %958 = vmatpush1.msra.mxu0 %v866
    %959 = vmatprep.subr.mxu0 0.0
    %960 = vmatpush1.msra.mxu0 0.0
    %961 = vmatprep.subr.mxu0 0.0
    %962 = vmatpush1.msra.mxu0 0.0
    %963 = vmatprep.subr.mxu0 0.0
    %964 = vmatpush1.msra.mxu0 0.0
    %965 = vmatprep.subr.mxu0 0.0
    %966 = vmatpush1.msra.mxu0 0.0
    %967 = vmatprep.subr.mxu0 0.0
    %968 = vmatpush1.msra.mxu0 0.0
    %969 = vmatprep.subr.mxu0 0.0
    %970 = vmatpush1.msra.mxu0 0.0
    %971 = vmatprep.subr.mxu0 0.0
    %972 = vmatpush1.msra.mxu0 0.0
    %973 = vmatprep.subr.mxu0 0.0
    %974 = vmatpush1.msra.mxu0 0.0
    %975 = vmatprep.subr.mxu0 0.0
    %976 = vmatpush1.msra.mxu0 0.0
    %977 = vmatprep.subr.mxu0 0.0
    %978 = vmatpush1.msra.mxu0 0.0
    %979 = vmatprep.subr.mxu0 0.0
    %980 = vmatpush1.msra.mxu0 0.0
    %981 = vmatprep.subr.mxu0 0.0
    %982 = vmatpush1.msra.mxu0 0.0
    %983 = vmatprep.subr.mxu0 0.0
    %984 = vmatpush1.msra.mxu0 0.0
    %985 = vmatprep.subr.mxu0 0.0
    %986 = vmatpush1.msra.mxu0 0.0
    %987 = vmatprep.subr.mxu0 0.0
    %988 = vmatpush1.msra.mxu0 0.0
    %989 = vmatprep.subr.mxu0 0.0
    %990 = vmatpush1.msra.mxu0 0.0
    %991 = vmatprep.subr.mxu0 0.0
    %992 = vmatpush1.msra.mxu0 0.0
    %993 = vmatprep.subr.mxu0 0.0
    %994 = vmatpush1.msra.mxu0 0.0
    %995 = vmatprep.subr.mxu0 0.0
    %996 = vmatpush1.msra.mxu0 0.0
    %997 = vmatprep.subr.mxu0 0.0
    %998 = vmatpush1.msra.mxu0 0.0
    %999 = vmatprep.subr.mxu0 0.0
    %1000 = vmatpush1.msra.mxu0 0.0
    %1001 = vmatprep.subr.mxu0 0.0
    %1002 = vmatpush1.msra.mxu0 0.0
    %1003 = vmatprep.subr.mxu0 0.0
    %1004 = vmatpush1.msra.mxu0 0.0
    %1005 = vmatprep.subr.mxu0 0.0
    %1006 = vmatpush1.msra.mxu0 0.0
    %1007 = vmatprep.subr.mxu0 0.0
    %1008 = vmatpush1.msra.mxu0 0.0
    %1009 = vmatprep.subr.mxu0 0.0
    %1010 = vmatpush1.msra.mxu0 0.0
    %1011 = vmatprep.subr.mxu0 0.0
    %1012 = vmatpush1.msra.mxu0 0.0
    %1013 = vmatprep.subr.mxu0 0.0
    %1014 = vmatpush1.msra.mxu0 0.0
    %1015 = vmatprep.subr.mxu0 0.0
    %1016 = vmatpush1.msra.mxu0 0.0
    %1017 = vmatprep.subr.mxu0 0.0
    %1018 = vmatpush1.msra.mxu0 0.0
    %1019 = vmatprep.mubr.f32.mxu0 0.0
    %1020 = vmatmul.mubr.f32.gmra.mrb[0].mxu0 %v953
    %v1021 = vpop.f32.mrb[0].mxu0
    %v1022 = vadd.f32 0.0, %v1021
    %v1023 = vpop.f32.mrb[0].mxu0
    %1024 = vdwg.mxu0
    %v1025 = vmul.f32 %v1022, 0.16666667
    %v1026 = vld [vmem:[#allocation11] sm:$0x1]
    %v1027 = vadd.f32 %v1025, 1e-05
    %v1028 = vrsqrt.pop %v1027
    %v1029 = vmul.f32 %v1026, %v1028
    %v1031 = vlaneseq
    %v1032 = vshrl.u32 %v1031, 7
    %v1033 = vsub.s32 0, %v1032
    %v1034 = vrot.slane %v1029, %v1033
    %v1036 = vmul.f32 %v943, %v1034
    %v1037 = vld [vmem:[#allocation13] sm:$0x1]
    %v1039 = vlaneseq
    %v1040 = vshrl.u32 %v1039, 7
    %v1041 = vsub.s32 0, %v1040
    %v1042 = vrot.slane %v1037, %v1041
    %v1044 = vadd.f32 %v1036, %v1042
    %v1045 = vmax.f32 %v1044, 0.0
    %v1046 = vld [vmem:[%s14] sm:$0xff]
    %v1047 = vld [vmem:[%s14 + $0x8] sm:$0xf]
    %v1048 = vld [vmem:[#allocation14] sm:$0x1]
    %v1050 = vlaneseq
    %v1051 = vshrl.u32 %v1050, 7
    %v1052 = vsub.s32 0, %v1051
    %v1053 = vrot.slane %v1048, %v1052
    %v1056 = vsel %vm861, %v1045, 0
    %v1059 = vsel %vm213, %v1047, 0
    %1061 = vmatprep.subr.mxu0 0.0
    %1062 = vmatpush1.msra.mxu0 %v1046
    %1063 = vmatprep.subr.mxu0 0.0
    %1064 = vmatpush1.msra.mxu0 %v1059
    %1065 = vmatprep.subr.mxu0 0.0
    %1066 = vmatpush1.msra.mxu0 0.0
    %1067 = vmatprep.subr.mxu0 0.0
    %1068 = vmatpush1.msra.mxu0 0.0
    %1069 = vmatprep.subr.mxu0 0.0
    %1070 = vmatpush1.msra.mxu0 0.0
    %1071 = vmatprep.subr.mxu0 0.0
    %1072 = vmatpush1.msra.mxu0 0.0
    %1073 = vmatprep.subr.mxu0 0.0
    %1074 = vmatpush1.msra.mxu0 0.0
    %1075 = vmatprep.subr.mxu0 0.0
    %1076 = vmatpush1.msra.mxu0 0.0
    %1077 = vmatprep.subr.mxu0 0.0
    %1078 = vmatpush1.msra.mxu0 0.0
    %1079 = vmatprep.subr.mxu0 0.0
    %1080 = vmatpush1.msra.mxu0 0.0
    %1081 = vmatprep.subr.mxu0 0.0
    %1082 = vmatpush1.msra.mxu0 0.0
    %1083 = vmatprep.subr.mxu0 0.0
    %1084 = vmatpush1.msra.mxu0 0.0
    %1085 = vmatprep.subr.mxu0 0.0
    %1086 = vmatpush1.msra.mxu0 0.0
    %1087 = vmatprep.subr.mxu0 0.0
    %1088 = vmatpush1.msra.mxu0 0.0
    %1089 = vmatprep.subr.mxu0 0.0
    %1090 = vmatpush1.msra.mxu0 0.0
    %1091 = vmatprep.subr.mxu0 0.0
    %1092 = vmatpush1.msra.mxu0 0.0
    %1093 = vmatprep.subr.mxu0 0.0
    %1094 = vmatpush1.msra.mxu0 0.0
    %1095 = vmatprep.subr.mxu0 0.0
    %1096 = vmatpush1.msra.mxu0 0.0
    %1097 = vmatprep.subr.mxu0 0.0
    %1098 = vmatpush1.msra.mxu0 0.0
    %1099 = vmatprep.subr.mxu0 0.0
    %1100 = vmatpush1.msra.mxu0 0.0
    %1101 = vmatprep.subr.mxu0 0.0
    %1102 = vmatpush1.msra.mxu0 0.0
    %1103 = vmatprep.subr.mxu0 0.0
    %1104 = vmatpush1.msra.mxu0 0.0
    %1105 = vmatprep.subr.mxu0 0.0
    %1106 = vmatpush1.msra.mxu0 0.0
    %1107 = vmatprep.subr.mxu0 0.0
    %1108 = vmatpush1.msra.mxu0 0.0
    %1109 = vmatprep.subr.mxu0 0.0
    %1110 = vmatpush1.msra.mxu0 0.0
    %1111 = vmatprep.subr.mxu0 0.0
    %1112 = vmatpush1.msra.mxu0 0.0
    %1113 = vmatprep.subr.mxu0 0.0
    %1114 = vmatpush1.msra.mxu0 0.0
    %1115 = vmatprep.subr.mxu0 0.0
    %1116 = vmatpush1.msra.mxu0 0.0
    %1117 = vmatprep.subr.mxu0 0.0
    %1118 = vmatpush1.msra.mxu0 0.0
    %1119 = vmatprep.subr.mxu0 0.0
    %1120 = vmatpush1.msra.mxu0 0.0
    %1121 = vmatprep.subr.mxu0 0.0
    %1122 = vmatpush1.msra.mxu0 0.0
    %1123 = vmatprep.subr.mxu0 0.0
    %1124 = vmatpush1.msra.mxu0 0.0
    %1125 = vmatprep.mubr.f32.mxu0 0.0
    %1126 = vmatmul.mubr.f32.gmra.mrb[0].mxu0 %v1056
    %v1127 = vpop.f32.mrb[0].mxu0
    %v1128 = vadd.f32 %v1053, %v1127
    %v1129 = vpop.f32.mrb[0].mxu0
    %1130 = vdwg.mxu0
    %v1131 = vld [vmem:[%s16] sm:$0xff]
    %v1132 = vld [vmem:[%s16 + $0x8] sm:$0xf]
    %v1133 = vld [vmem:[#allocation16] sm:$0x1]
    %v1135 = vlaneseq
    %v1136 = vshrl.u32 %v1135, 7
    %v1137 = vsub.s32 0, %v1136
    %v1138 = vrot.slane %v1133, %v1137
    %v1141 = vsel %vm213, %v1132, 0
    %1143 = vmatprep.subr.mxu0 0.0
    %1144 = vmatpush1.msra.mxu0 %v1131
    %1145 = vmatprep.subr.mxu0 0.0
    %1146 = vmatpush1.msra.mxu0 %v1141
    %1147 = vmatprep.subr.mxu0 0.0
    %1148 = vmatpush1.msra.mxu0 0.0
    %1149 = vmatprep.subr.mxu0 0.0
    %1150 = vmatpush1.msra.mxu0 0.0
    %1151 = vmatprep.subr.mxu0 0.0
    %1152 = vmatpush1.msra.mxu0 0.0
    %1153 = vmatprep.subr.mxu0 0.0
    %1154 = vmatpush1.msra.mxu0 0.0
    %1155 = vmatprep.subr.mxu0 0.0
    %1156 = vmatpush1.msra.mxu0 0.0
    %1157 = vmatprep.subr.mxu0 0.0
    %1158 = vmatpush1.msra.mxu0 0.0
    %1159 = vmatprep.subr.mxu0 0.0
    %1160 = vmatpush1.msra.mxu0 0.0
    %1161 = vmatprep.subr.mxu0 0.0
    %1162 = vmatpush1.msra.mxu0 0.0
    %1163 = vmatprep.subr.mxu0 0.0
    %1164 = vmatpush1.msra.mxu0 0.0
    %1165 = vmatprep.subr.mxu0 0.0
    %1166 = vmatpush1.msra.mxu0 0.0
    %1167 = vmatprep.subr.mxu0 0.0
    %1168 = vmatpush1.msra.mxu0 0.0
    %1169 = vmatprep.subr.mxu0 0.0
    %1170 = vmatpush1.msra.mxu0 0.0
    %1171 = vmatprep.subr.mxu0 0.0
    %1172 = vmatpush1.msra.mxu0 0.0
    %1173 = vmatprep.subr.mxu0 0.0
    %1174 = vmatpush1.msra.mxu0 0.0
    %1175 = vmatprep.subr.mxu0 0.0
    %1176 = vmatpush1.msra.mxu0 0.0
    %1177 = vmatprep.subr.mxu0 0.0
    %1178 = vmatpush1.msra.mxu0 0.0
    %1179 = vmatprep.subr.mxu0 0.0
    %1180 = vmatpush1.msra.mxu0 0.0
    %1181 = vmatprep.subr.mxu0 0.0
    %1182 = vmatpush1.msra.mxu0 0.0
    %1183 = vmatprep.subr.mxu0 0.0
    %1184 = vmatpush1.msra.mxu0 0.0
    %1185 = vmatprep.subr.mxu0 0.0
    %1186 = vmatpush1.msra.mxu0 0.0
    %1187 = vmatprep.subr.mxu0 0.0
    %1188 = vmatpush1.msra.mxu0 0.0
    %1189 = vmatprep.subr.mxu0 0.0
    %1190 = vmatpush1.msra.mxu0 0.0
    %1191 = vmatprep.subr.mxu0 0.0
    %1192 = vmatpush1.msra.mxu0 0.0
    %1193 = vmatprep.subr.mxu0 0.0
    %1194 = vmatpush1.msra.mxu0 0.0
    %1195 = vmatprep.subr.mxu0 0.0
    %1196 = vmatpush1.msra.mxu0 0.0
    %1197 = vmatprep.subr.mxu0 0.0
    %1198 = vmatpush1.msra.mxu0 0.0
    %1199 = vmatprep.subr.mxu0 0.0
    %1200 = vmatpush1.msra.mxu0 0.0
    %1201 = vmatprep.subr.mxu0 0.0
    %1202 = vmatpush1.msra.mxu0 0.0
    %1203 = vmatprep.subr.mxu0 0.0
    %1204 = vmatpush1.msra.mxu0 0.0
    %1205 = vmatprep.subr.mxu0 0.0
    %1206 = vmatpush1.msra.mxu0 0.0
    %1207 = vmatprep.mubr.f32.mxu0 0.0
    %1208 = vmatmul.mubr.f32.gmra.mrb[0].mxu0 %v1056
    %v1209 = vpop.f32.mrb[0].mxu0
    %v1210 = vadd.f32 %v1138, %v1209
    %v1211 = vpop.f32.mrb[0].mxu0
    %1212 = vdwg.mxu0
    %v1213 = vld [vmem:[%s1] sm:$0x3]
    %v1214 = vmul.f32 %v1210, 0.5
    %v1215 = vmul.f32 %v1214, 1.442695
    %v1216 = vpow.pop %v1215
    %v1217 = vmul.f32 %v1213, %v1216
    %v1218 = vadd.f32 %v1128, %v1217
    %v1219 = vld [vmem:[%s18] sm:$0xff]
    %v1220 = vld [vmem:[%s18 + $0x8] sm:$0xff]
    %v1221 = vld [vmem:[%s19] sm:$0x3]
    %v1223 = vlaneseq
    %v1224 = vshrl.u32 %v1223, 7
    %v1225 = vsub.s32 0, %v1224
    %v1226 = vrot.slane %v1221, %v1225
    %v1227 = vlaneseq
    %v1228 = vshrl.u32 %v1227, 7
    %v1229 = vsub.s32 1, %v1228
    %v1230 = vrot.slane %v1221, %v1229
    %vm1233 = vcmask 64512
    %v1235 = vsel %vm1233, %v1218, 0
    %1237 = vmatprep.subr.mxu0 %v1220
    %1238 = vmatpush1.msra.mxu0 %v1219
    %1239 = vmatprep.subr.mxu0 0.0
    %1240 = vmatpush1.msra.mxu0 0.0
    %1241 = vmatprep.subr.mxu0 0.0
    %1242 = vmatpush1.msra.mxu0 0.0
    %1243 = vmatprep.subr.mxu0 0.0
    %1244 = vmatpush1.msra.mxu0 0.0
    %1245 = vmatprep.subr.mxu0 0.0
    %1246 = vmatpush1.msra.mxu0 0.0
    %1247 = vmatprep.subr.mxu0 0.0
    %1248 = vmatpush1.msra.mxu0 0.0
    %1249 = vmatprep.subr.mxu0 0.0
    %1250 = vmatpush1.msra.mxu0 0.0
    %1251 = vmatprep.subr.mxu0 0.0
    %1252 = vmatpush1.msra.mxu0 0.0
    %1253 = vmatprep.subr.mxu0 0.0
    %1254 = vmatpush1.msra.mxu0 0.0
    %1255 = vmatprep.subr.mxu0 0.0
    %1256 = vmatpush1.msra.mxu0 0.0
    %1257 = vmatprep.subr.mxu0 0.0
    %1258 = vmatpush1.msra.mxu0 0.0
    %1259 = vmatprep.subr.mxu0 0.0
    %1260 = vmatpush1.msra.mxu0 0.0
    %1261 = vmatprep.subr.mxu0 0.0
    %1262 = vmatpush1.msra.mxu0 0.0
    %1263 = vmatprep.subr.mxu0 0.0
    %1264 = vmatpush1.msra.mxu0 0.0
    %1265 = vmatprep.subr.mxu0 0.0
    %1266 = vmatpush1.msra.mxu0 0.0
    %1267 = vmatprep.subr.mxu0 0.0
    %1268 = vmatpush1.msra.mxu0 0.0
    %1269 = vmatprep.subr.mxu0 0.0
    %1270 = vmatpush1.msra.mxu0 0.0
    %1271 = vmatprep.subr.mxu0 0.0
    %1272 = vmatpush1.msra.mxu0 0.0
    %1273 = vmatprep.subr.mxu0 0.0
    %1274 = vmatpush1.msra.mxu0 0.0
    %1275 = vmatprep.subr.mxu0 0.0
    %1276 = vmatpush1.msra.mxu0 0.0
    %1277 = vmatprep.subr.mxu0 0.0
    %1278 = vmatpush1.msra.mxu0 0.0
    %1279 = vmatprep.subr.mxu0 0.0
    %1280 = vmatpush1.msra.mxu0 0.0
    %1281 = vmatprep.subr.mxu0 0.0
    %1282 = vmatpush1.msra.mxu0 0.0
    %1283 = vmatprep.subr.mxu0 0.0
    %1284 = vmatpush1.msra.mxu0 0.0
    %1285 = vmatprep.subr.mxu0 0.0
    %1286 = vmatpush1.msra.mxu0 0.0
    %1287 = vmatprep.subr.mxu0 0.0
    %1288 = vmatpush1.msra.mxu0 0.0
    %1289 = vmatprep.subr.mxu0 0.0
    %1290 = vmatpush1.msra.mxu0 0.0
    %1291 = vmatprep.subr.mxu0 0.0
    %1292 = vmatpush1.msra.mxu0 0.0
    %1293 = vmatprep.subr.mxu0 0.0
    %1294 = vmatpush1.msra.mxu0 0.0
    %1295 = vmatprep.subr.mxu0 0.0
    %1296 = vmatpush1.msra.mxu0 0.0
    %1297 = vmatprep.subr.mxu0 0.0
    %1298 = vmatpush1.msra.mxu0 0.0
    %1299 = vmatprep.subr.mxu0 0.0
    %1300 = vmatpush1.msra.mxu0 0.0
    %1301 = vmatprep.mubr.f32.mxu0 0.0
    %1302 = vmatmul.mubr.f32.gmra.mrb[0].mxu0 %v1235
    %v1303 = vpop.f32.mrb[0].mxu0
    %v1304 = vadd.f32 %v1226, %v1303
    %v1305 = vpop.f32.mrb[0].mxu0
    %v1306 = vadd.f32 %v1230, %v1305
    %1307 = vdwg.mxu0
    %v1310 = vcombine.low %v1304, %v1306
    %v1312 = vunpack.c.l.s4 1983009808
    %v1313 = vunpack.c.0.s8 %v1312
    %v1314 = vlaneseq
    %v1315 = vshrl.u32 %v1314, 7
    %v1316 = vsub.s32 %v1313, %v1315
    %v1317 = vrot.slane %v1310, %v1316
    %vm1319 = vcmask 1041408
    %vm1320 = vcmask 420866
    %vm1321 = vmor %vm1320, %vm1319
    %1322 = vst.msk [vmem:[%s20] sm:$0xf] %vm1321, %v1317
    %vm1323 = vcmask 58368
    %1324 = vst.msk [vmem:[#allocation17] sm:$0x3] %vm1323, %v1128
    %1325 = vst.msk [vmem:[#allocation18] sm:$0x3] %vm1323, %v1210
    // Predicated region
    $region118: #{cvae_forward.1} parent=1 // pred_check
      _
    $region119: #{cvae_forward.1} parent=1 // pred_check_branch
      %1327 = sbr.rel (0) target = $region121
    $region120: #{cvae_forward.1} parent=1 // pred_region
      _
    $region121: #{cvae_forward.1} parent=1 // pred_fallthru
      _
    // Predicated region
    $region122: #{cvae_forward.1} parent=1 // pred_check
      _
    $region123: #{cvae_forward.1} parent=1 // pred_check_branch
      %1329 = sbr.rel (0) target = $region125
    $region124: #{cvae_forward.1} parent=1 // pred_region
      %s1331 = ssub.s32 32, 32
      %1332 = vsyncadd [#allocation4], %s1331
      %s1334 = sshll.u32 [#allocation17], 4
      %s1335 = int_to_ptr.vmem [resolvable:$true] %s1334
      %1337 = dma.vmem_to_hbm [thread:$0]  %s1335, 32, %s21, [#allocation4]
    $region125: #{cvae_forward.1} parent=1 // pred_fallthru
      _
    // Predicated region
    $region126: #{cvae_forward.1} parent=1 // pred_check
      _
    $region127: #{cvae_forward.1} parent=1 // pred_check_branch
      %1339 = sbr.rel (0) target = $region129
    $region128: #{cvae_forward.1} parent=1 // pred_region
      %s1341 = ssub.s32 32, 32
      %1342 = vsyncadd [#allocation19], %s1341
      %s1344 = sshll.u32 [#allocation18], 4
      %s1345 = int_to_ptr.vmem [resolvable:$true] %s1344
      %1347 = dma.vmem_to_hbm [thread:$0]  %s1345, 32, %s22, [#allocation19]
    $region129: #{cvae_forward.1} parent=1 // pred_fallthru
      _
    // Predicated region
    $region130: #{cvae_forward.1} parent=1 // pred_check
      _
    $region131: #{cvae_forward.1} parent=1 // pred_check_branch
      %1349 = sbr.rel (0) target = $region133
    $region132: #{cvae_forward.1} parent=1 // pred_region
      _
    $region133: #{cvae_forward.1} parent=1 // pred_fallthru
      _
    // Predicated region
    $region134: #{cvae_forward.1} parent=1 // pred_check
      _
    $region135: #{cvae_forward.1} parent=1 // pred_check_branch
      %1351 = sbr.rel (0) target = $region137
    $region136: #{cvae_forward.1} parent=1 // pred_region
      %1352 = dma.done [#allocation4], 32
    $region137: #{cvae_forward.1} parent=1 // pred_fallthru
      _
    // Predicated region
    $region138: #{cvae_forward.1} parent=1 // pred_check
      _
    $region139: #{cvae_forward.1} parent=1 // pred_check_branch
      %1354 = sbr.rel (0) target = $region141
    $region140: #{cvae_forward.1} parent=1 // pred_region
      %1355 = dma.done [#allocation19], 32
    $region141: #{cvae_forward.1} parent=1 // pred_fallthru
      _
    %1356 = vsyncpa [#allocation3], 1
    %1357 = vsyncpa [#allocation6], 1
    %1358 = vsyncpa [#allocation9], 1
    %1359 = vsyncpa [#allocation12], 1
    %1360 = vsyncpa [#allocation15], 1
    %1361 = vsyncpa [#allocation4], 1
    %1362 = vsyncpa [#allocation19], 1

</llo_original>
